<compile_context>
chip_gen: v6e
topology: v6e:2x2x1
jax: 0.10.0
libtpu: 0.0.40
codegen_flags: <defaults>
</compile_context>

<pallas_src>
import functools

import jax
import jax.numpy as jnp
from jax import lax
from jax.experimental import pallas as pl
from jax.experimental.pallas import tpu as pltpu

EPS = 1e-5


# --------------------------------------------------------------------------
# Kernels
# --------------------------------------------------------------------------
def _layernorm_relu(h, gamma, beta):
    """f32 LayerNorm (one-pass stats) + ReLU epilogue on an (TM, D) tile."""
    mean = jnp.mean(h, axis=-1, keepdims=True)
    msq = jnp.mean(h * h, axis=-1, keepdims=True)
    var = msq - mean * mean
    y = (h - mean) * lax.rsqrt(var + EPS)
    y = y * gamma + beta
    # dropout has p=0.0 (inference) -> identity; then ReLU.
    # TODO(synk): stochastic dropout (p>0, training mode) not implemented.
    return jnp.maximum(y, 0.0)


def _resident_kernel(x_ref, w_ref, b_ref, g_ref, beta_ref, o_ref):
    # x_ref:    (TM, F)  caller dtype (f32), cast to bf16 in-kernel
    # w_ref:    (F, D)   bf16, whole weight resident (constant index map)
    # b/g/beta: (1, D)   f32 params
    # o_ref:    (TM, D)  output tile
    x = x_ref[...].astype(jnp.bfloat16)
    h = jnp.dot(x, w_ref[...], preferred_element_type=jnp.float32) + b_ref[...]
    o_ref[...] = _layernorm_relu(h, g_ref[...], beta_ref[...]).astype(o_ref.dtype)


def _ktiled_kernel(x_ref, w_ref, b_ref, g_ref, beta_ref, o_ref, acc_ref, *, tk, feat):
    # Streaming-weight path: K is the last ("arbitrary") grid axis.
    # x_ref: (TM, TK) caller dtype; w_ref: (TK, D) bf16 (zero-padded K tail);
    # acc_ref: (TM, D) f32 scratch resident across the K axis.
    k = pl.program_id(1)
    nk = pl.num_programs(1)

    x = x_ref[...]
    if feat % tk != 0:
        # Mask the ragged K tail (the padded weight rows are already zero).
        col = lax.broadcasted_iota(jnp.int32, x.shape, 1) + k * tk
        x = jnp.where(col < feat, x, 0.0)

    part = jnp.dot(x.astype(jnp.bfloat16), w_ref[...],
                   preferred_element_type=jnp.float32)

    @pl.when(k == 0)
    def _():
        # Fold the bias into the first partial product (no zero-init pass).
        acc_ref[...] = part + b_ref[...]

    @pl.when(jnp.logical_and(k > 0, k < nk - 1))
    def _():
        acc_ref[...] += part

    @pl.when(k == nk - 1)
    def _():
        # Combine in registers; run the epilogue; single store.
        h = acc_ref[...] + part
        o_ref[...] = _layernorm_relu(h, g_ref[...], beta_ref[...]).astype(o_ref.dtype)


# --------------------------------------------------------------------------
# Wrapper
# --------------------------------------------------------------------------
def _round_up(x, m):
    return ((x + m - 1) // m) * m


def _pick_row_tiles(rows, fits, vmem_cap):
    """Largest row tile (multiple of 8) whose working set fits the VMEM budget,
    then balance the tile count (even count on v7x-like chips: 2 TensorCores)."""
    rows_pad = _round_up(rows, 8)
    cap = min(8, rows_pad)
    for cand in (2048, 1024, 512, 256, 128, 64, 32, 16, 8):
        eff = min(cand, rows_pad)
        if fits(eff):
            cap = eff
            break
    num_tiles = pl.cdiv(rows, cap)
    if vmem_cap <= 96 * 1024 * 1024:   # v7x-like: 64 MiB per-TC VMEM, 2 TCs
        if num_tiles == 1 and rows >= 256:
            num_tiles = 2
        elif num_tiles > 1 and num_tiles % 2 == 1:
            num_tiles += 1
    tile_rows = _round_up(pl.cdiv(rows, num_tiles), 8)
    return tile_rows, pl.cdiv(rows, tile_rows)


def linear_proj(x, w, b, gamma, beta, *, out_dtype=None,
                max_resident_weight_bytes=None, tile_k=None):
    """
    x:     (N, T, F)  input features
    w:     (F, D)     projection weight (transpose of nn.Linear .weight)
    b:     (D,)       projection bias
    gamma: (D,)       LayerNorm weight
    beta:  (D,)       LayerNorm bias
    returns (N, T, D)
    """
    N, T, F = x.shape
    D = w.shape[1]
    rows = N * T
    if out_dtype is None:
        out_dtype = x.dtype            # pass jnp.bfloat16 to halve writeback
    out_elt = jnp.dtype(out_dtype).itemsize

    # Generation-aware VMEM budget.
    try:
        info = pltpu.get_tpu_info()
        vmem_cap = int(getattr(info, "vmem_capacity_bytes", 0)) or 64 * 1024 * 1024
    except Exception:
        vmem_cap = 64 * 1024 * 1024    # conservative (v7x per-TC VMEM)
    vmem_budget = int(vmem_cap * 0.75)

    x2 = x.reshape(rows, F)            # no dtype convert / no row pad in wrapper
    x_elt = x2.dtype.itemsize
    wv = w.astype(jnp.bfloat16)        # one-time param cast (tiny)
    b2 = b.reshape(1, D).astype(jnp.float32)
    g2 = gamma.reshape(1, D).astype(jnp.float32)
    be2 = beta.reshape(1, D).astype(jnp.float32)

    weight_bytes = F * D * 2
    resident_cap = max_resident_weight_bytes
    if resident_cap is None:
        resident_cap = min(vmem_budget // 3, 16 * 1024 * 1024)

    use_resident = (tile_k is None) and (weight_bytes <= resident_cap)
    tk = None
    if not use_resident:
        if tile_k is not None:
            tk = max(128, (int(tile_k) // 128) * 128)
        else:
            tk = 1024
            while tk > 128 and 2 * tk * D * 2 > vmem_budget // 4:
                tk //= 2
        tk = min(tk, pl.cdiv(F, 128) * 128)
        if F <= tk:                    # fewer than 2 K steps -> resident path
            use_resident = True

    flops = 2 * rows * F * D

    if use_resident:
        # ------------------- resident-weight path --------------------------
        def fits(tr):
            return (2 * weight_bytes            # weight (counted conservatively)
                    + 2 * tr * F * x_elt        # x tile, double-buffered
                    + 2 * tr * D * out_elt      # out tile, double-buffered
                    + 6 * D * 4) <= vmem_budget

        tile_rows, num_row_tiles = _pick_row_tiles(rows, fits, vmem_cap)
        est = (2 * weight_bytes + 2 * tile_rows * F * x_elt
               + 2 * tile_rows * D * out_elt + 6 * D * 4)
        vmem_limit = int(min(vmem_budget, max(est * 5 // 4, 4 * 1024 * 1024)))
        cost = pl.CostEstimate(
            flops=flops, transcendentals=rows,
            bytes_accessed=rows * F * x_elt + weight_bytes
            + rows * D * out_elt + 3 * D * 4)

        out2 = pl.pallas_call(
            _resident_kernel,
            out_shape=jax.ShapeDtypeStruct((rows, D), out_dtype),
            grid_spec=pltpu.PrefetchScalarGridSpec(
                num_scalar_prefetch=0,
                grid=(num_row_tiles,),
                in_specs=[
                    pl.BlockSpec((tile_rows, F), lambda i: (i, 0)),   # x rows
                    pl.BlockSpec((F, D), lambda i: (0, 0)),           # W resident
                    pl.BlockSpec((1, D), lambda i: (0, 0)),           # bias
                    pl.BlockSpec((1, D), lambda i: (0, 0)),           # gamma
                    pl.BlockSpec((1, D), lambda i: (0, 0)),           # beta
                ],
                out_specs=pl.BlockSpec((tile_rows, D), lambda i: (i, 0)),
            ),
            compiler_params=pltpu.CompilerParams(
                dimension_semantics=("parallel",),
                vmem_limit_bytes=vmem_limit,
            ),
            cost_estimate=cost,
        )(x2, wv, b2, g2, be2)
    else:
        # ------------------- streaming-weight (K-tiled) path ---------------
        padded_F = pl.cdiv(F, tk) * tk
        num_k = padded_F // tk
        # Zero-pad the K tail of the (small) weight once; x tail is masked
        # in-kernel, so no pad pass over x is needed.
        wv_p = wv if padded_F == F else jnp.pad(wv, ((0, padded_F - F), (0, 0)))

        def fits(tr):
            return (2 * tr * tk * x_elt         # x tile, double-buffered
                    + 2 * tk * D * 2            # W tile bf16, double-buffered
                    + 2 * tr * D * out_elt      # out tile, double-buffered
                    + tr * D * 4                # f32 accumulator scratch
                    + 6 * D * 4) <= vmem_budget

        tile_rows, num_row_tiles = _pick_row_tiles(rows, fits, vmem_cap)
        est = (2 * tile_rows * tk * x_elt + 2 * tk * D * 2
               + 2 * tile_rows * D * out_elt + tile_rows * D * 4 + 6 * D * 4)
        vmem_limit = int(min(vmem_budget, max(est * 5 // 4, 4 * 1024 * 1024)))
        cost = pl.CostEstimate(
            flops=flops, transcendentals=rows,
            bytes_accessed=rows * F * x_elt
            + num_row_tiles * padded_F * D * 2      # W re-streamed per row tile
            + rows * D * out_elt + 3 * D * 4)

        kernel = functools.partial(_ktiled_kernel, tk=tk, feat=F)
        out2 = pl.pallas_call(
            kernel,
            out_shape=jax.ShapeDtypeStruct((rows, D), out_dtype),
            grid_spec=pltpu.PrefetchScalarGridSpec(
                num_scalar_prefetch=0,
                grid=(num_row_tiles, num_k),
                in_specs=[
                    pl.BlockSpec((tile_rows, tk), lambda i, k: (i, k)),  # x
                    pl.BlockSpec((tk, D), lambda i, k: (k, 0)),          # W
                    pl.BlockSpec((1, D), lambda i, k: (0, 0)),           # bias
                    pl.BlockSpec((1, D), lambda i, k: (0, 0)),           # gamma
                    pl.BlockSpec((1, D), lambda i, k: (0, 0)),           # beta
                ],
                out_specs=pl.BlockSpec((tile_rows, D), lambda i, k: (i, 0)),
                scratch_shapes=[pltpu.VMEM((tile_rows, D), jnp.float32)],
            ),
            compiler_params=pltpu.CompilerParams(
                dimension_semantics=("parallel", "arbitrary"),
                vmem_limit_bytes=vmem_limit,
            ),
            cost_estimate=cost,
        )(x2, wv_p, b2, g2, be2)

    return out2.reshape(N, T, D)


# --------------------------------------------------------------------------
# Pure-JAX reference (matmul operands in bf16 / f32 accumulation to match the
# kernel's MXU precision; rest matches the PyTorch module with dropout p=0).
# --------------------------------------------------------------------------
def linear_proj_ref(x, w, b, gamma, beta):
    h = jnp.einsum(
        "ntf,fd->ntd",
        x.astype(jnp.bfloat16), w.astype(jnp.bfloat16),
        preferred_element_type=jnp.float32,
    ) + b
    mean = jnp.mean(h, axis=-1, keepdims=True)
    var = jnp.mean((h - mean) ** 2, axis=-1, keepdims=True)
    y = (h - mean) / jnp.sqrt(var + EPS)
    y = y * gamma + beta
    return jnp.maximum(y, 0.0)


if __name__ == "__main__":
    # Small shapes consistent with the module's N x T x F input. rows (N*T) is
    # intentionally not a multiple of the row tile so partial row blocks are
    # exercised; D is a multiple of 128 for lane-dense output stores.
    N, T, F, D = 2, 300, 512, 256

    key = jax.random.PRNGKey(0)
    kx, kw, kb = jax.random.split(key, 3)

    x = jax.random.normal(kx, (N, T, F), dtype=jnp.float32)

    # Deterministic synthetic parameters.
    # nn.Linear(input_size=F, embed_dim=D): weight (D, F), bias (D,)
    w_pt = jax.random.normal(kw, (D, F), dtype=jnp.float32) * (1.0 / jnp.sqrt(F))
    b_pt = jax.random.normal(kb, (D,), dtype=jnp.float32) * 0.01
    w = w_pt.T                                   # (F, D) for x @ W^T
    gamma = jnp.ones((D,), dtype=jnp.float32)    # LayerNorm default init
    beta = jnp.zeros((D,), dtype=jnp.float32)

    ref = linear_proj_ref(x, w, b_pt, gamma, beta)

    # 1) Default (resident-weight) path.
    out = jax.block_until_ready(linear_proj(x, w, b_pt, gamma, beta))
    assert out.shape == (N, T, D)
    assert jnp.allclose(out, ref, atol=2e-3, rtol=2e-3), "resident path mismatch"

    # 2) Force the streaming (K-tiled) path: exercises the accumulator
    #    init/accumulate/finalize specialization (4 K steps).
    out_k = jax.block_until_ready(
        linear_proj(x, w, b_pt, gamma, beta, tile_k=128))
    assert jnp.allclose(out_k, ref, atol=2e-3, rtol=2e-3), "k-tiled path mismatch"

    # 3) Streaming path with a K tile that does not divide F: exercises the
    #    ragged-F tail masking + zero-padded weight tail.
    out_r = jax.block_until_ready(
        linear_proj(x, w, b_pt, gamma, beta, tile_k=384))
    assert jnp.allclose(out_r, ref, atol=2e-3, rtol=2e-3), "ragged-K path mismatch"

    print("KERNEL_OK")
</pallas_src>

<mosaic_0001>
module attributes {stable_mosaic.version = 11 : i64} {
  func.func @_resident_kernel(%arg0: i32, %arg1: memref<304x512xf32, #tpu.memory_space<vmem>>, %arg2: memref<512x256xbf16, #tpu.memory_space<vmem>>, %arg3: memref<1x256xf32, #tpu.memory_space<vmem>>, %arg4: memref<1x256xf32, #tpu.memory_space<vmem>>, %arg5: memref<1x256xf32, #tpu.memory_space<vmem>>, %arg6: memref<304x256xf32, #tpu.memory_space<vmem>>) attributes {dimension_semantics = [#tpu.dimension_semantics<parallel>], iteration_bounds = array<i64: 2>, scalar_prefetch = 0 : i64, scratch_operands = 0 : i64, tpu.core_type = #tpu.core_type<tc>, window_params = [{transform_indices = @transform_0, window_bounds = array<i64: 304, 512>}, {pipeline_mode = #tpu.pipeline_mode<synchronous>, transform_indices = @transform_1, window_bounds = array<i64: 512, 256>}, {pipeline_mode = #tpu.pipeline_mode<synchronous>, transform_indices = @transform_2, window_bounds = array<i64: 1, 256>}, {pipeline_mode = #tpu.pipeline_mode<synchronous>, transform_indices = @transform_3, window_bounds = array<i64: 1, 256>}, {pipeline_mode = #tpu.pipeline_mode<synchronous>, transform_indices = @transform_4, window_bounds = array<i64: 1, 256>}, {transform_indices = @transform_5, window_bounds = array<i64: 304, 256>}]} {
    %c0 = arith.constant 0 : index
    %c0_0 = arith.constant 0 : index
    %0 = vector.load %arg1[%c0, %c0_0] : memref<304x512xf32, #tpu.memory_space<vmem>>, vector<304x512xf32>
    %1 = arith.truncf %0 : vector<304x512xf32> to vector<304x512xbf16>
    %c0_1 = arith.constant 0 : index
    %c0_2 = arith.constant 0 : index
    %2 = vector.load %arg2[%c0_1, %c0_2] : memref<512x256xbf16, #tpu.memory_space<vmem>>, vector<512x256xbf16>
    %cst = arith.constant dense<0.000000e+00> : vector<304x256xf32>
    %3 = tpu.matmul %1, %2, %cst {dimension_numbers = #tpu.dot_dimension_numbers<[1], [0], [0], [1], [0, 0, 1, 1], [], []>} : vector<304x512xbf16>, vector<512x256xbf16>, vector<304x256xf32> -> vector<304x256xf32>
    %c0_3 = arith.constant 0 : index
    %c0_4 = arith.constant 0 : index
    %4 = vector.load %arg3[%c0_3, %c0_4] : memref<1x256xf32, #tpu.memory_space<vmem>>, vector<1x256xf32>
    %5 = vector.broadcast %4 : vector<1x256xf32> to vector<304x256xf32>
    %6 = arith.addf %3, %5 : vector<304x256xf32>
    %c0_5 = arith.constant 0 : index
    %c0_6 = arith.constant 0 : index
    %7 = vector.load %arg4[%c0_5, %c0_6] : memref<1x256xf32, #tpu.memory_space<vmem>>, vector<1x256xf32>
    %c0_7 = arith.constant 0 : index
    %c0_8 = arith.constant 0 : index
    %8 = vector.load %arg5[%c0_7, %c0_8] : memref<1x256xf32, #tpu.memory_space<vmem>>, vector<1x256xf32>
    %cst_9 = arith.constant dense<0.000000e+00> : vector<304xf32>
    %9 = vector.multi_reduction <add>, %6, %cst_9 [1] : vector<304x256xf32> to vector<304xf32>
    %10 = vector.shape_cast %9 : vector<304xf32> to vector<304x1xf32>
    %cst_10 = arith.constant 2.560000e+02 : f32
    %11 = vector.broadcast %cst_10 : f32 to vector<304x1xf32>
    %12 = arith.divf %10, %11 : vector<304x1xf32>
    %13 = arith.mulf %6, %6 : vector<304x256xf32>
    %cst_11 = arith.constant dense<0.000000e+00> : vector<304xf32>
    %14 = vector.multi_reduction <add>, %13, %cst_11 [1] : vector<304x256xf32> to vector<304xf32>
    %15 = vector.shape_cast %14 : vector<304xf32> to vector<304x1xf32>
    %cst_12 = arith.constant 2.560000e+02 : f32
    %16 = vector.broadcast %cst_12 : f32 to vector<304x1xf32>
    %17 = arith.divf %15, %16 : vector<304x1xf32>
    %18 = arith.mulf %12, %12 : vector<304x1xf32>
    %19 = arith.subf %17, %18 : vector<304x1xf32>
    %20 = vector.broadcast %12 : vector<304x1xf32> to vector<304x256xf32>
    %21 = arith.subf %6, %20 : vector<304x256xf32>
    %cst_13 = arith.constant 9.99999974E-6 : f32
    %22 = vector.broadcast %cst_13 : f32 to vector<304x1xf32>
    %23 = arith.addf %19, %22 : vector<304x1xf32>
    %24 = math.rsqrt %23 : vector<304x1xf32>
    %25 = vector.broadcast %24 : vector<304x1xf32> to vector<304x256xf32>
    %26 = arith.mulf %21, %25 : vector<304x256xf32>
    %27 = vector.broadcast %7 : vector<1x256xf32> to vector<304x256xf32>
    %28 = arith.mulf %26, %27 : vector<304x256xf32>
    %29 = vector.broadcast %8 : vector<1x256xf32> to vector<304x256xf32>
    %30 = arith.addf %28, %29 : vector<304x256xf32>
    %cst_14 = arith.constant 0.000000e+00 : f32
    %31 = vector.broadcast %cst_14 : f32 to vector<304x256xf32>
    %32 = arith.maximumf %30, %31 : vector<304x256xf32>
    %c0_15 = arith.constant 0 : index
    %c0_16 = arith.constant 0 : index
    %33 = vector.load %arg6[%c0_15, %c0_16] : memref<304x256xf32, #tpu.memory_space<vmem>>, vector<304x256xf32>
    tpu.vector_store %arg6[%c0_15, %c0_16], %32 {strides = array<i32>} : memref<304x256xf32, #tpu.memory_space<vmem>>, vector<304x256xf32>,
    return
  }
  func.func @transform_0(%arg0: i32) -> (i32, i32) {
    %c0_i32 = arith.constant 0 : i32
    %c0_i32_0 = arith.constant 0 : i32
    return %arg0, %c0_i32 : i32, i32
  }
  func.func @transform_1(%arg0: i32) -> (i32, i32) {
    %c0_i32 = arith.constant 0 : i32
    %c0_i32_0 = arith.constant 0 : i32
    %c0_i32_1 = arith.constant 0 : i32
    return %c0_i32, %c0_i32_0 : i32, i32
  }
  func.func @transform_2(%arg0: i32) -> (i32, i32) {
    %c0_i32 = arith.constant 0 : i32
    %c0_i32_0 = arith.constant 0 : i32
    %c0_i32_1 = arith.constant 0 : i32
    return %c0_i32, %c0_i32_0 : i32, i32
  }
  func.func @transform_3(%arg0: i32) -> (i32, i32) {
    %c0_i32 = arith.constant 0 : i32
    %c0_i32_0 = arith.constant 0 : i32
    %c0_i32_1 = arith.constant 0 : i32
    return %c0_i32, %c0_i32_0 : i32, i32
  }
  func.func @transform_4(%arg0: i32) -> (i32, i32) {
    %c0_i32 = arith.constant 0 : i32
    %c0_i32_0 = arith.constant 0 : i32
    %c0_i32_1 = arith.constant 0 : i32
    return %c0_i32, %c0_i32_0 : i32, i32
  }
  func.func @transform_5(%arg0: i32) -> (i32, i32) {
    %c0_i32 = arith.constant 0 : i32
    %c0_i32_0 = arith.constant 0 : i32
    return %arg0, %c0_i32 : i32, i32
  }
}

</mosaic_0001>

<llo_original>
// kernel: tpu_custom_call.1
$region0: #{tpu_custom_call.1}
  #allocation0 [shape = 'u32[]', space=smem, size = 0x4, offset = 0x4, fixed_abs, tag = 'smem constant byte address 0x4 - core index']
  #allocation1 [shape = 'u32[144,128]{1,0:T(1,128)}', space=vmem, size = 0x12000, scoped, tag = 'internal scratch']
  %s0 = inlined_call_operand.hbm [shape: f32[600,512], index: 0, kind: input, shape index: {}]
  %s1 = inlined_call_operand.hbm [shape: bf16[512,256], index: 1, kind: input, shape index: {}]
  %s2 = inlined_call_operand.hbm [shape: f32[1,256], index: 2, kind: input, shape index: {}]
  %s3 = inlined_call_operand.hbm [shape: f32[1,256], index: 3, kind: input, shape index: {}]
  %s4 = inlined_call_operand.hbm [shape: f32[1,256], index: 4, kind: input, shape index: {}]
  %s5 = inlined_call_operand.hbm [shape: f32[600,256], index: 5, kind: output, shape index: {}]
  %s6 = sld [smem:[#allocation0]]
  $region73: #{tpu_custom_call.1} parent=0
    _
  %s8 = ssub.s32 1, %s6
  %s9 = scalar_select 0, %s8, %s6
  $region1: #{tpu_custom_call.1} parent=0
    #allocation2 [shape = 'u8[1245184]{0}', space=vmem, size = 0x130000, scoped, tag = 'input window, operand 0']
    #allocation3 [shape = 's32[2]{0}', space=sflag, size = 0x8, scoped, tag = 'scoped memory for tpu_custom_call.1']
    #allocation4 [shape = 's32[2]{0}', space=sflag, size = 0x8, scoped, tag = 'scoped memory for tpu_custom_call.1']
    #allocation5 [shape = 'u8[262144]{0}', space=vmem, size = 0x40000, scoped, tag = 'input window, operand 1, single buffered']
    #allocation6 [shape = 's32[1]{0}', space=sflag, size = 0x4, scoped, tag = 'scoped memory for tpu_custom_call.1']
    #allocation7 [shape = 'u8[1024]{0}', space=vmem, size = 0x400, scoped, tag = 'input window, operand 2, single buffered']
    #allocation8 [shape = 'u8[1024]{0}', space=vmem, size = 0x400, scoped, tag = 'input window, operand 3, single buffered']
    #allocation9 [shape = 's32[1]{0}', space=sflag, size = 0x4, scoped, tag = 'scoped memory for tpu_custom_call.1']
    #allocation10 [shape = 'u8[1024]{0}', space=vmem, size = 0x400, scoped, tag = 'input window, operand 4, single buffered']
    #allocation11 [shape = 'u8[622592]{0}', space=vmem, size = 0x98000, scoped, tag = 'output window, operand 0']
    %10 = vsyncpa [#allocation3], 0
    %s11 = scalar_lea.sflag [#allocation3], 1
    %12 = vsyncpa %s11, 0
    %13 = vsyncpa [#allocation6], 0
    %14 = vsyncpa [#allocation9], 0
    %15 = vsyncpa [#allocation4], 0
    %s16 = scalar_lea.sflag [#allocation4], 1
    %17 = vsyncpa %s16, 0
    loop: start=0, step=1, limit=4
    $region2: #{tpu_custom_call.1} parent=1 // loop_pre_header
      _
    $region3: #{tpu_custom_call.1} parent=1 // loop_header
      %s19 = sphi 0, %s23
      %p20 = scmp.ge.s32.totalorder %s19, 4
      %s29 = sphi 0, %s31
      %s32 = sphi 0, %s29
      %s33 = sphi 0, %s32
      %s49 = sphi 0, %s33
      %s53 = sphi 0, %s53
      %s55 = sphi 0, %s53
      %s56 = sphi 0, %s55
      %s70 = sphi 0, %s56
      %s74 = sphi 0, %s74
      %s76 = sphi 0, %s74
      %s77 = sphi 0, %s76
      %s91 = sphi 0, %s77
      %s95 = sphi 0, %s95
      %s97 = sphi 0, %s95
      %s98 = sphi 0, %s97
      %s112 = sphi 0, %s98
      %s116 = sphi 0, %s116
      %s118 = sphi 0, %s116
      %s119 = sphi 0, %s118
      %s133 = sphi 0, %s119
      %s139 = sphi 0, %s141
      %s142 = sphi 0, %s139
      %s143 = sphi 0, %s142
      %s159 = sphi 0, %s143
    $region4: #{tpu_custom_call.1} parent=1 // loop_header_branch
      %22 = sbr.rel (%p20) target = $region8
    $region5: #{tpu_custom_call.1} parent=1 // loop_body
      %s24 = ssub.s32 %s19, 1
      %s25 = ssub.s32 %s19, 2
      %s26 = sadd.s32 %s19, 1
      %s27 = ssub.s32 %s19, %s26
      %p28 = scmp.eq.s32.totalorder %s27, 0
      %s30 = sadd.s32 %s29, 1
      %s31 = scalar_select %p28, %s29, %s30
      %p34 = pneg %p28
      %p35 = scmp.eq.s32.totalorder %s19, 1
      %p36 = por %p34, %p35
      %p37 = scmp.ne.s32.totalorder %s29, %s32
      %p38 = scmp.eq.s32.totalorder %s19, 0
      %p39 = por %p37, %p38
      %p40 = scmp.ne.s32.totalorder %s29, %s32
      %p41 = scmp.eq.s32.totalorder %s24, 1
      %p42 = por %p40, %p41
      %p43 = scmp.ne.s32.totalorder %s32, %s33
      %p44 = scmp.eq.s32.totalorder %s24, 0
      %p45 = por %p43, %p44
      %p46 = scmp.ne.s32.totalorder %s32, %s33
      %p47 = scmp.eq.s32.totalorder %s25, 1
      %p48 = por %p46, %p47
      %p50 = scmp.ne.s32.totalorder %s33, %s49
      %p51 = scmp.eq.s32.totalorder %s25, 0
      %p52 = por %p50, %p51
      %s54 = sadd.s32 %s53, 1
      %p57 = scmp.eq.s32.totalorder %s19, 1
      %p58 = scmp.ne.s32.totalorder %s53, %s55
      %p59 = scmp.eq.s32.totalorder %s19, 0
      %p60 = por %p58, %p59
      %p61 = scmp.ne.s32.totalorder %s53, %s55
      %p62 = scmp.eq.s32.totalorder %s24, 1
      %p63 = por %p61, %p62
      %p64 = scmp.ne.s32.totalorder %s55, %s56
      %p65 = scmp.eq.s32.totalorder %s24, 0
      %p66 = por %p64, %p65
      %p67 = scmp.ne.s32.totalorder %s55, %s56
      %p68 = scmp.eq.s32.totalorder %s25, 1
      %p69 = por %p67, %p68
      %p71 = scmp.ne.s32.totalorder %s56, %s70
      %p72 = scmp.eq.s32.totalorder %s25, 0
      %p73 = por %p71, %p72
      %s75 = sadd.s32 %s74, 1
      %p78 = scmp.eq.s32.totalorder %s19, 1
      %p79 = scmp.ne.s32.totalorder %s74, %s76
      %p80 = scmp.eq.s32.totalorder %s19, 0
      %p81 = por %p79, %p80
      %p82 = scmp.ne.s32.totalorder %s74, %s76
      %p83 = scmp.eq.s32.totalorder %s24, 1
      %p84 = por %p82, %p83
      %p85 = scmp.ne.s32.totalorder %s76, %s77
      %p86 = scmp.eq.s32.totalorder %s24, 0
      %p87 = por %p85, %p86
      %p88 = scmp.ne.s32.totalorder %s76, %s77
      %p89 = scmp.eq.s32.totalorder %s25, 1
      %p90 = por %p88, %p89
      %p92 = scmp.ne.s32.totalorder %s77, %s91
      %p93 = scmp.eq.s32.totalorder %s25, 0
      %p94 = por %p92, %p93
      %s96 = sadd.s32 %s95, 1
      %p99 = scmp.eq.s32.totalorder %s19, 1
      %p100 = scmp.ne.s32.totalorder %s95, %s97
      %p101 = scmp.eq.s32.totalorder %s19, 0
      %p102 = por %p100, %p101
      %p103 = scmp.ne.s32.totalorder %s95, %s97
      %p104 = scmp.eq.s32.totalorder %s24, 1
      %p105 = por %p103, %p104
      %p106 = scmp.ne.s32.totalorder %s97, %s98
      %p107 = scmp.eq.s32.totalorder %s24, 0
      %p108 = por %p106, %p107
      %p109 = scmp.ne.s32.totalorder %s97, %s98
      %p110 = scmp.eq.s32.totalorder %s25, 1
      %p111 = por %p109, %p110
      %p113 = scmp.ne.s32.totalorder %s98, %s112
      %p114 = scmp.eq.s32.totalorder %s25, 0
      %p115 = por %p113, %p114
      %s117 = sadd.s32 %s116, 1
      %p120 = scmp.eq.s32.totalorder %s19, 1
      %p121 = scmp.ne.s32.totalorder %s116, %s118
      %p122 = scmp.eq.s32.totalorder %s19, 0
      %p123 = por %p121, %p122
      %p124 = scmp.ne.s32.totalorder %s116, %s118
      %p125 = scmp.eq.s32.totalorder %s24, 1
      %p126 = por %p124, %p125
      %p127 = scmp.ne.s32.totalorder %s118, %s119
      %p128 = scmp.eq.s32.totalorder %s24, 0
      %p129 = por %p127, %p128
      %p130 = scmp.ne.s32.totalorder %s118, %s119
      %p131 = scmp.eq.s32.totalorder %s25, 1
      %p132 = por %p130, %p131
      %p134 = scmp.ne.s32.totalorder %s119, %s133
      %p135 = scmp.eq.s32.totalorder %s25, 0
      %p136 = por %p134, %p135
      %s137 = ssub.s32 %s19, %s26
      %p138 = scmp.eq.s32.totalorder %s137, 0
      %s140 = sadd.s32 %s139, 1
      %s141 = scalar_select %p138, %s139, %s140
      %p144 = pneg %p138
      %p145 = scmp.eq.s32.totalorder %s19, 1
      %p146 = por %p144, %p145
      %p147 = scmp.ne.s32.totalorder %s139, %s142
      %p148 = scmp.eq.s32.totalorder %s19, 0
      %p149 = por %p147, %p148
      %p150 = scmp.ne.s32.totalorder %s139, %s142
      %p151 = scmp.eq.s32.totalorder %s24, 1
      %p152 = por %p150, %p151
      %p153 = scmp.ne.s32.totalorder %s142, %s143
      %p154 = scmp.eq.s32.totalorder %s24, 0
      %p155 = por %p153, %p154
      %p156 = scmp.ne.s32.totalorder %s142, %s143
      %p157 = scmp.eq.s32.totalorder %s25, 1
      %p158 = por %p156, %p157
      %p160 = scmp.ne.s32.totalorder %s143, %s159
      %p161 = scmp.eq.s32.totalorder %s25, 0
      %p162 = por %p160, %p161
      %p163 = scmp.le.s32.totalorder 1, %s19
      %p164 = scmp.lt.s32.totalorder %s19, 3
      %p165 = pnand %p163, %p164
      %p166 = pneg %p165
      // Predicated region
      $region9: #{tpu_custom_call.1} parent=5 // pred_check
        _
      $region10: #{tpu_custom_call.1} parent=5 // pred_check_branch
        %168 = sbr.rel (%p165) target = $region12
      $region11: #{tpu_custom_call.1} parent=5 // pred_region
        %s169 = ssub.s32 %s19, 1
        // Predicated region
        $region13: #{tpu_custom_call.1} parent=11 // pred_check
          %p170 = pneg %p66
        $region14: #{tpu_custom_call.1} parent=11 // pred_check_branch
          %172 = sbr.rel (%p170) target = $region16
        $region15: #{tpu_custom_call.1} parent=11 // pred_region
          %s174 = ssub.s32 8192, 8192
          %175 = vsyncadd [#allocation6], %s174
          %s176 = sshll.u32 [#allocation5], 4
          %s177 = int_to_ptr.vmem [resolvable:$true] %s176
          %182 = dma.hbm_to_vmem [thread:$0]  %s1, 8192, %s177, [#allocation6], 128, 128, 8
        $region16: #{tpu_custom_call.1} parent=11 // pred_fallthru
          _
        // Predicated region
        $region17: #{tpu_custom_call.1} parent=11 // pred_check
          %p183 = pneg %p87
        $region18: #{tpu_custom_call.1} parent=11 // pred_check_branch
          %185 = sbr.rel (%p183) target = $region20
        $region19: #{tpu_custom_call.1} parent=11 // pred_region
          %s187 = ssub.s32 32, 32
          %188 = vsyncadd [#allocation6], %s187
          %s190 = sshll.u32 [#allocation7], 4
          %s191 = int_to_ptr.vmem [resolvable:$true] %s190
          %193 = dma.hbm_to_vmem [thread:$0]  %s2, 32, %s191, [#allocation6]
        $region20: #{tpu_custom_call.1} parent=11 // pred_fallthru
          _
        // Predicated region
        $region21: #{tpu_custom_call.1} parent=11 // pred_check
          %p194 = pneg %p108
        $region22: #{tpu_custom_call.1} parent=11 // pred_check_branch
          %196 = sbr.rel (%p194) target = $region24
        $region23: #{tpu_custom_call.1} parent=11 // pred_region
          %s198 = ssub.s32 32, 32
          %199 = vsyncadd [#allocation9], %s198
          %s201 = sshll.u32 [#allocation8], 4
          %s202 = int_to_ptr.vmem [resolvable:$true] %s201
          %204 = dma.hbm_to_vmem [thread:$0]  %s3, 32, %s202, [#allocation9]
        $region24: #{tpu_custom_call.1} parent=11 // pred_fallthru
          _
        // Predicated region
        $region25: #{tpu_custom_call.1} parent=11 // pred_check
          %p205 = pneg %p129
        $region26: #{tpu_custom_call.1} parent=11 // pred_check_branch
          %207 = sbr.rel (%p205) target = $region28
        $region27: #{tpu_custom_call.1} parent=11 // pred_region
          %s209 = ssub.s32 32, 32
          %210 = vsyncadd [#allocation9], %s209
          %s212 = sshll.u32 [#allocation10], 4
          %s213 = int_to_ptr.vmem [resolvable:$true] %s212
          %215 = dma.hbm_to_vmem [thread:$0]  %s4, 32, %s213, [#allocation9]
        $region28: #{tpu_custom_call.1} parent=11 // pred_fallthru
          _
      $region12: #{tpu_custom_call.1} parent=5 // pred_fallthru
        _
      %p216 = scmp.lt.s32.totalorder %s19, 2
      // Predicated region
      $region29: #{tpu_custom_call.1} parent=5 // pred_check
        %p217 = pneg %p216
      $region30: #{tpu_custom_call.1} parent=5 // pred_check_branch
        %219 = sbr.rel (%p217) target = $region32
      $region31: #{tpu_custom_call.1} parent=5 // pred_region
        // Predicated region
        $region33: #{tpu_custom_call.1} parent=31 // pred_check
          %p220 = pneg %p39
        $region34: #{tpu_custom_call.1} parent=31 // pred_check_branch
          %222 = sbr.rel (%p220) target = $region36
        $region35: #{tpu_custom_call.1} parent=31 // pred_region
          %s223 = sand.u32 %s29, 1
          %s224 = scalar_lea.sflag [#allocation3], %s223
          %s225 = sand.u32 %s29, 1
          %s226 = smul.addr %s225, 1216
          %s227 = scalar_lea.vmem [#allocation2], %s226
          %s228 = smul.u32 38, %s19
          %s229 = ssub.s32 75, %s228
          %p230 = scmp.lt.s32.totalorder %s229, 38
          %s231 = scalar_select %p230, %s229, 38
          %s232 = smul.u32 128, %s231
          %s233 = smul.u32 %s232, 4
          %s235 = ssub.s32 19456, %s233
          %236 = vsyncadd %s224, %s235
          %p237 = scmp.ne.s32.totalorder 0, %s233
          %s238 = smul.addr %s228, 4
          %s239 = smul.addr %s238, 128
          %s240 = scalar_lea.hbm %s0, %s239
          %s241 = smul.u32 32, %s231
          %s242 = sshll.u32 %s227, 4
          %s243 = int_to_ptr.vmem [resolvable:$true] %s242
          %s244 = sshll.u32 %s241, 4
          %248 = dma.hbm_to_vmem [thread:$0]  (%p237), %s240, %s244, %s243, %s224, 512, 512, 32
        $region36: #{tpu_custom_call.1} parent=31 // pred_fallthru
          _
      $region32: #{tpu_custom_call.1} parent=5 // pred_fallthru
        _
      %p249 = scmp.le.s32.totalorder 1, %s19
      %p250 = scmp.lt.s32.totalorder %s19, 3
      %p251 = pnand %p249, %p250
      %p252 = pneg %p251
      // Predicated region
      $region37: #{tpu_custom_call.1} parent=5 // pred_check
        _
      $region38: #{tpu_custom_call.1} parent=5 // pred_check_branch
        %254 = sbr.rel (%p251) target = $region40
      $region39: #{tpu_custom_call.1} parent=5 // pred_region
        %s255 = ssub.s32 %s19, 1
        %s256 = sand.u32 %s32, 1
        %s257 = scalar_lea.sflag [#allocation3], %s256
        %s258 = sand.u32 %s32, 1
        %s259 = smul.addr %s258, 1216
        %s260 = scalar_lea.vmem [#allocation2], %s259
        // Predicated region
        $region41: #{tpu_custom_call.1} parent=39 // pred_check
          %p261 = pneg %p45
        $region42: #{tpu_custom_call.1} parent=39 // pred_check_branch
          %263 = sbr.rel (%p261) target = $region44
        $region43: #{tpu_custom_call.1} parent=39 // pred_region
          %264 = dma.done %s257, 19456
        $region44: #{tpu_custom_call.1} parent=39 // pred_fallthru
          _
        // Predicated region
        $region45: #{tpu_custom_call.1} parent=39 // pred_check
          %p265 = pneg %p66
        $region46: #{tpu_custom_call.1} parent=39 // pred_check_branch
          %267 = sbr.rel (%p265) target = $region48
        $region47: #{tpu_custom_call.1} parent=39 // pred_region
          %268 = dma.done [#allocation6], 8192
        $region48: #{tpu_custom_call.1} parent=39 // pred_fallthru
          _
        // Predicated region
        $region49: #{tpu_custom_call.1} parent=39 // pred_check
          %p269 = pneg %p87
        $region50: #{tpu_custom_call.1} parent=39 // pred_check_branch
          %271 = sbr.rel (%p269) target = $region52
        $region51: #{tpu_custom_call.1} parent=39 // pred_region
          %272 = dma.done [#allocation6], 32
        $region52: #{tpu_custom_call.1} parent=39 // pred_fallthru
          _
        // Predicated region
        $region53: #{tpu_custom_call.1} parent=39 // pred_check
          %p273 = pneg %p108
        $region54: #{tpu_custom_call.1} parent=39 // pred_check_branch
          %275 = sbr.rel (%p273) target = $region56
        $region55: #{tpu_custom_call.1} parent=39 // pred_region
          %276 = dma.done [#allocation9], 32
        $region56: #{tpu_custom_call.1} parent=39 // pred_fallthru
          _
        // Predicated region
        $region57: #{tpu_custom_call.1} parent=39 // pred_check
          %p277 = pneg %p129
        $region58: #{tpu_custom_call.1} parent=39 // pred_check_branch
          %279 = sbr.rel (%p277) target = $region60
        $region59: #{tpu_custom_call.1} parent=39 // pred_region
          %280 = dma.done [#allocation9], 32
        $region60: #{tpu_custom_call.1} parent=39 // pred_fallthru
          _
        %s281 = sand.u32 %s32, 1
        %s282 = scalar_lea.sflag [#allocation3], %s281
        %s283 = sand.u32 %s32, 1
        %s284 = smul.addr %s283, 1216
        %s285 = scalar_lea.vmem [#allocation2], %s284
        %p286 = pneg %p45
        %p287 = pneg %p42
        %p288 = pneg %p66
        %p289 = pneg %p63
        %p290 = pneg %p87
        %p291 = pneg %p84
        %p292 = pneg %p108
        %p293 = pneg %p105
        %p294 = pneg %p129
        %p295 = pneg %p126
        %p296 = pneg %p155
        %p297 = pneg %p152
        %s298 = sand.u32 %s142, 1
        %s299 = scalar_lea.sflag [#allocation4], %s298
        %s300 = sand.u32 %s142, 1
        %s301 = smul.addr %s300, 608
        %s302 = scalar_lea.vmem [#allocation11], %s301
        %s303 = smul.u32 38, %s24
        %s304 = ssub.s32 75, %s303
        %p305 = scmp.lt.s32.totalorder %s304, 38
        %s306 = scalar_select %p305, %s304, 38
        %s307 = smul.u32 128, %s306
        %s308 = smul.u32 %s307, 4
        %s309 = smul.u32 38, %s24
        %s310 = ssub.s32 75, %s309
        %p311 = scmp.lt.s32.totalorder %s310, 38
        %s312 = scalar_select %p311, %s310, 38
        %s313 = smul.u32 128, %s312
        %s314 = smul.u32 %s313, 2
        %v315 = vld [vmem:[%s260] sm:$0xff]
        %v316 = vld [vmem:[%s260 + $0x8] sm:$0xff]
        %v317 = vld [vmem:[%s260 + $0x10] sm:$0xff]
        %v318 = vld [vmem:[%s260 + $0x18] sm:$0xff]
        %v319 = vld [vmem:[%s260 + $0x20] sm:$0xff]
        %v320 = vld [vmem:[%s260 + $0x28] sm:$0xff]
        %v321 = vld [vmem:[%s260 + $0x30] sm:$0xff]
        %v322 = vld [vmem:[%s260 + $0x38] sm:$0xff]
        %v323 = vld [vmem:[%s260 + $0x40] sm:$0xff]
        %v324 = vld [vmem:[%s260 + $0x48] sm:$0xff]
        %v325 = vld [vmem:[%s260 + $0x50] sm:$0xff]
        %v326 = vld [vmem:[%s260 + $0x58] sm:$0xff]
        %v327 = vld [vmem:[%s260 + $0x60] sm:$0xff]
        %v328 = vld [vmem:[%s260 + $0x68] sm:$0xff]
        %v329 = vld [vmem:[%s260 + $0x70] sm:$0xff]
        %v330 = vld [vmem:[%s260 + $0x78] sm:$0xff]
        %v331 = vld [vmem:[%s260 + $0x80] sm:$0xff]
        %v332 = vld [vmem:[%s260 + $0x88] sm:$0xff]
        %v333 = vld [vmem:[%s260 + $0x90] sm:$0xff]
        %v334 = vld [vmem:[%s260 + $0x98] sm:$0xff]
        %v335 = vld [vmem:[%s260 + $0xa0] sm:$0xff]
        %v336 = vld [vmem:[%s260 + $0xa8] sm:$0xff]
        %v337 = vld [vmem:[%s260 + $0xb0] sm:$0xff]
        %v338 = vld [vmem:[%s260 + $0xb8] sm:$0xff]
        %v339 = vld [vmem:[%s260 + $0xc0] sm:$0xff]
        %v340 = vld [vmem:[%s260 + $0xc8] sm:$0xff]
        %v341 = vld [vmem:[%s260 + $0xd0] sm:$0xff]
        %v342 = vld [vmem:[%s260 + $0xd8] sm:$0xff]
        %v343 = vld [vmem:[%s260 + $0xe0] sm:$0xff]
        %v344 = vld [vmem:[%s260 + $0xe8] sm:$0xff]
        %v345 = vld [vmem:[%s260 + $0xf0] sm:$0xff]
        %v346 = vld [vmem:[%s260 + $0xf8] sm:$0xff]
        %v347 = vld [vmem:[%s260 + $0x100] sm:$0xff]
        %v348 = vld [vmem:[%s260 + $0x108] sm:$0xff]
        %v349 = vld [vmem:[%s260 + $0x110] sm:$0xff]
        %v350 = vld [vmem:[%s260 + $0x118] sm:$0xff]
        %v351 = vld [vmem:[%s260 + $0x120] sm:$0xff]
        %v352 = vld [vmem:[%s260 + $0x128] sm:$0xff]
        %v353 = vld [vmem:[%s260 + $0x130] sm:$0xff]
        %v354 = vld [vmem:[%s260 + $0x138] sm:$0xff]
        %v355 = vld [vmem:[%s260 + $0x140] sm:$0xff]
        %v356 = vld [vmem:[%s260 + $0x148] sm:$0xff]
        %v357 = vld [vmem:[%s260 + $0x150] sm:$0xff]
        %v358 = vld [vmem:[%s260 + $0x158] sm:$0xff]
        %v359 = vld [vmem:[%s260 + $0x160] sm:$0xff]
        %v360 = vld [vmem:[%s260 + $0x168] sm:$0xff]
        %v361 = vld [vmem:[%s260 + $0x170] sm:$0xff]
        %v362 = vld [vmem:[%s260 + $0x178] sm:$0xff]
        %v363 = vld [vmem:[%s260 + $0x180] sm:$0xff]
        %v364 = vld [vmem:[%s260 + $0x188] sm:$0xff]
        %v365 = vld [vmem:[%s260 + $0x190] sm:$0xff]
        %v366 = vld [vmem:[%s260 + $0x198] sm:$0xff]
        %v367 = vld [vmem:[%s260 + $0x1a0] sm:$0xff]
        %v368 = vld [vmem:[%s260 + $0x1a8] sm:$0xff]
        %v369 = vld [vmem:[%s260 + $0x1b0] sm:$0xff]
        %v370 = vld [vmem:[%s260 + $0x1b8] sm:$0xff]
        %v371 = vld [vmem:[%s260 + $0x1c0] sm:$0xff]
        %v372 = vld [vmem:[%s260 + $0x1c8] sm:$0xff]
        %v373 = vld [vmem:[%s260 + $0x1d0] sm:$0xff]
        %v374 = vld [vmem:[%s260 + $0x1d8] sm:$0xff]
        %v375 = vld [vmem:[%s260 + $0x1e0] sm:$0xff]
        %v376 = vld [vmem:[%s260 + $0x1e8] sm:$0xff]
        %v377 = vld [vmem:[%s260 + $0x1f0] sm:$0xff]
        %v378 = vld [vmem:[%s260 + $0x1f8] sm:$0xff]
        %v379 = vld [vmem:[%s260 + $0x200] sm:$0xff]
        %v380 = vld [vmem:[%s260 + $0x208] sm:$0xff]
        %v381 = vld [vmem:[%s260 + $0x210] sm:$0xff]
        %v382 = vld [vmem:[%s260 + $0x218] sm:$0xff]
        %v383 = vld [vmem:[%s260 + $0x220] sm:$0xff]
        %v384 = vld [vmem:[%s260 + $0x228] sm:$0xff]
        %v385 = vld [vmem:[%s260 + $0x230] sm:$0xff]
        %v386 = vld [vmem:[%s260 + $0x238] sm:$0xff]
        %v387 = vld [vmem:[%s260 + $0x240] sm:$0xff]
        %v388 = vld [vmem:[%s260 + $0x248] sm:$0xff]
        %v389 = vld [vmem:[%s260 + $0x250] sm:$0xff]
        %v390 = vld [vmem:[%s260 + $0x258] sm:$0xff]
        %v391 = vld [vmem:[%s260 + $0x260] sm:$0xff]
        %v392 = vld [vmem:[%s260 + $0x268] sm:$0xff]
        %v393 = vld [vmem:[%s260 + $0x270] sm:$0xff]
        %v394 = vld [vmem:[%s260 + $0x278] sm:$0xff]
        %v395 = vld [vmem:[%s260 + $0x280] sm:$0xff]
        %v396 = vld [vmem:[%s260 + $0x288] sm:$0xff]
        %v397 = vld [vmem:[%s260 + $0x290] sm:$0xff]
        %v398 = vld [vmem:[%s260 + $0x298] sm:$0xff]
        %v399 = vld [vmem:[%s260 + $0x2a0] sm:$0xff]
        %v400 = vld [vmem:[%s260 + $0x2a8] sm:$0xff]
        %v401 = vld [vmem:[%s260 + $0x2b0] sm:$0xff]
        %v402 = vld [vmem:[%s260 + $0x2b8] sm:$0xff]
        %v403 = vld [vmem:[%s260 + $0x2c0] sm:$0xff]
        %v404 = vld [vmem:[%s260 + $0x2c8] sm:$0xff]
        %v405 = vld [vmem:[%s260 + $0x2d0] sm:$0xff]
        %v406 = vld [vmem:[%s260 + $0x2d8] sm:$0xff]
        %v407 = vld [vmem:[%s260 + $0x2e0] sm:$0xff]
        %v408 = vld [vmem:[%s260 + $0x2e8] sm:$0xff]
        %v409 = vld [vmem:[%s260 + $0x2f0] sm:$0xff]
        %v410 = vld [vmem:[%s260 + $0x2f8] sm:$0xff]
        %v411 = vld [vmem:[%s260 + $0x300] sm:$0xff]
        %v412 = vld [vmem:[%s260 + $0x308] sm:$0xff]
        %v413 = vld [vmem:[%s260 + $0x310] sm:$0xff]
        %v414 = vld [vmem:[%s260 + $0x318] sm:$0xff]
        %v415 = vld [vmem:[%s260 + $0x320] sm:$0xff]
        %v416 = vld [vmem:[%s260 + $0x328] sm:$0xff]
        %v417 = vld [vmem:[%s260 + $0x330] sm:$0xff]
        %v418 = vld [vmem:[%s260 + $0x338] sm:$0xff]
        %v419 = vld [vmem:[%s260 + $0x340] sm:$0xff]
        %v420 = vld [vmem:[%s260 + $0x348] sm:$0xff]
        %v421 = vld [vmem:[%s260 + $0x350] sm:$0xff]
        %v422 = vld [vmem:[%s260 + $0x358] sm:$0xff]
        %v423 = vld [vmem:[%s260 + $0x360] sm:$0xff]
        %v424 = vld [vmem:[%s260 + $0x368] sm:$0xff]
        %v425 = vld [vmem:[%s260 + $0x370] sm:$0xff]
        %v426 = vld [vmem:[%s260 + $0x378] sm:$0xff]
        %v427 = vld [vmem:[%s260 + $0x380] sm:$0xff]
        %v428 = vld [vmem:[%s260 + $0x388] sm:$0xff]
        %v429 = vld [vmem:[%s260 + $0x390] sm:$0xff]
        %v430 = vld [vmem:[%s260 + $0x398] sm:$0xff]
        %v431 = vld [vmem:[%s260 + $0x3a0] sm:$0xff]
        %v432 = vld [vmem:[%s260 + $0x3a8] sm:$0xff]
        %v433 = vld [vmem:[%s260 + $0x3b0] sm:$0xff]
        %v434 = vld [vmem:[%s260 + $0x3b8] sm:$0xff]
        %v435 = vld [vmem:[%s260 + $0x3c0] sm:$0xff]
        %v436 = vld [vmem:[%s260 + $0x3c8] sm:$0xff]
        %v437 = vld [vmem:[%s260 + $0x3d0] sm:$0xff]
        %v438 = vld [vmem:[%s260 + $0x3d8] sm:$0xff]
        %v439 = vld [vmem:[%s260 + $0x3e0] sm:$0xff]
        %v440 = vld [vmem:[%s260 + $0x3e8] sm:$0xff]
        %v441 = vld [vmem:[%s260 + $0x3f0] sm:$0xff]
        %v442 = vld [vmem:[%s260 + $0x3f8] sm:$0xff]
        %v443 = vld [vmem:[%s260 + $0x400] sm:$0xff]
        %v444 = vld [vmem:[%s260 + $0x408] sm:$0xff]
        %v445 = vld [vmem:[%s260 + $0x410] sm:$0xff]
        %v446 = vld [vmem:[%s260 + $0x418] sm:$0xff]
        %v447 = vld [vmem:[%s260 + $0x420] sm:$0xff]
        %v448 = vld [vmem:[%s260 + $0x428] sm:$0xff]
        %v449 = vld [vmem:[%s260 + $0x430] sm:$0xff]
        %v450 = vld [vmem:[%s260 + $0x438] sm:$0xff]
        %v451 = vld [vmem:[%s260 + $0x440] sm:$0xff]
        %v452 = vld [vmem:[%s260 + $0x448] sm:$0xff]
        %v453 = vld [vmem:[%s260 + $0x450] sm:$0xff]
        %v454 = vld [vmem:[%s260 + $0x458] sm:$0xff]
        %v455 = vld [vmem:[%s260 + $0x460] sm:$0xff]
        %v456 = vld [vmem:[%s260 + $0x468] sm:$0xff]
        %v457 = vld [vmem:[%s260 + $0x470] sm:$0xff]
        %v458 = vld [vmem:[%s260 + $0x478] sm:$0xff]
        %v459 = vld [vmem:[%s260 + $0x480] sm:$0xff]
        %v460 = vld [vmem:[%s260 + $0x488] sm:$0xff]
        %v461 = vld [vmem:[%s260 + $0x490] sm:$0xff]
        %v462 = vld [vmem:[%s260 + $0x498] sm:$0xff]
        %v463 = vld [vmem:[%s260 + $0x4a0] sm:$0xff]
        %v464 = vld [vmem:[%s260 + $0x4a8] sm:$0xff]
        %v465 = vld [vmem:[%s260 + $0x4b0] sm:$0xff]
        %v466 = vld [vmem:[%s260 + $0x4b8] sm:$0xff]
        %v467 = vpack.c.bf16 %v319, %v315
        %v468 = vpack.c.bf16 %v320, %v316
        %v469 = vpack.c.bf16 %v321, %v317
        %v470 = vpack.c.bf16 %v322, %v318
        %v471 = vpack.c.bf16 %v327, %v323
        %v472 = vpack.c.bf16 %v328, %v324
        %v473 = vpack.c.bf16 %v329, %v325
        %v474 = vpack.c.bf16 %v330, %v326
        %v475 = vpack.c.bf16 %v335, %v331
        %v476 = vpack.c.bf16 %v336, %v332
        %v477 = vpack.c.bf16 %v337, %v333
        %v478 = vpack.c.bf16 %v338, %v334
        %v479 = vpack.c.bf16 %v343, %v339
        %v480 = vpack.c.bf16 %v344, %v340
        %v481 = vpack.c.bf16 %v345, %v341
        %v482 = vpack.c.bf16 %v346, %v342
        %v483 = vpack.c.bf16 %v351, %v347
        %v484 = vpack.c.bf16 %v352, %v348
        %v485 = vpack.c.bf16 %v353, %v349
        %v486 = vpack.c.bf16 %v354, %v350
        %v487 = vpack.c.bf16 %v359, %v355
        %v488 = vpack.c.bf16 %v360, %v356
        %v489 = vpack.c.bf16 %v361, %v357
        %v490 = vpack.c.bf16 %v362, %v358
        %v491 = vpack.c.bf16 %v367, %v363
        %v492 = vpack.c.bf16 %v368, %v364
        %v493 = vpack.c.bf16 %v369, %v365
        %v494 = vpack.c.bf16 %v370, %v366
        %v495 = vpack.c.bf16 %v375, %v371
        %v496 = vpack.c.bf16 %v376, %v372
        %v497 = vpack.c.bf16 %v377, %v373
        %v498 = vpack.c.bf16 %v378, %v374
        %v499 = vpack.c.bf16 %v383, %v379
        %v500 = vpack.c.bf16 %v384, %v380
        %v501 = vpack.c.bf16 %v385, %v381
        %v502 = vpack.c.bf16 %v386, %v382
        %v503 = vpack.c.bf16 %v391, %v387
        %v504 = vpack.c.bf16 %v392, %v388
        %v505 = vpack.c.bf16 %v393, %v389
        %v506 = vpack.c.bf16 %v394, %v390
        %v507 = vpack.c.bf16 %v399, %v395
        %v508 = vpack.c.bf16 %v400, %v396
        %v509 = vpack.c.bf16 %v401, %v397
        %v510 = vpack.c.bf16 %v402, %v398
        %v511 = vpack.c.bf16 %v407, %v403
        %v512 = vpack.c.bf16 %v408, %v404
        %v513 = vpack.c.bf16 %v409, %v405
        %v514 = vpack.c.bf16 %v410, %v406
        %v515 = vpack.c.bf16 %v415, %v411
        %v516 = vpack.c.bf16 %v416, %v412
        %v517 = vpack.c.bf16 %v417, %v413
        %v518 = vpack.c.bf16 %v418, %v414
        %v519 = vpack.c.bf16 %v423, %v419
        %v520 = vpack.c.bf16 %v424, %v420
        %v521 = vpack.c.bf16 %v425, %v421
        %v522 = vpack.c.bf16 %v426, %v422
        %v523 = vpack.c.bf16 %v431, %v427
        %v524 = vpack.c.bf16 %v432, %v428
        %v525 = vpack.c.bf16 %v433, %v429
        %v526 = vpack.c.bf16 %v434, %v430
        %v527 = vpack.c.bf16 %v439, %v435
        %v528 = vpack.c.bf16 %v440, %v436
        %v529 = vpack.c.bf16 %v441, %v437
        %v530 = vpack.c.bf16 %v442, %v438
        %v531 = vpack.c.bf16 %v447, %v443
        %v532 = vpack.c.bf16 %v448, %v444
        %v533 = vpack.c.bf16 %v449, %v445
        %v534 = vpack.c.bf16 %v450, %v446
        %v535 = vpack.c.bf16 %v455, %v451
        %v536 = vpack.c.bf16 %v456, %v452
        %v537 = vpack.c.bf16 %v457, %v453
        %v538 = vpack.c.bf16 %v458, %v454
        %v539 = vpack.c.bf16 %v463, %v459
        %v540 = vpack.c.bf16 %v464, %v460
        %v541 = vpack.c.bf16 %v465, %v461
        %v542 = vpack.c.bf16 %v466, %v462
        %v543 = vld [vmem:[#allocation5] sm:$0xff]
        %v544 = vld [vmem:[#allocation5 + $0x8] sm:$0xff]
        %v545 = vld [vmem:[#allocation5 + $0x10] sm:$0xff]
        %v546 = vld [vmem:[#allocation5 + $0x18] sm:$0xff]
        %v547 = vld [vmem:[#allocation5 + $0x20] sm:$0xff]
        %v548 = vld [vmem:[#allocation5 + $0x28] sm:$0xff]
        %v549 = vld [vmem:[#allocation5 + $0x30] sm:$0xff]
        %v550 = vld [vmem:[#allocation5 + $0x38] sm:$0xff]
        %v551 = vld [vmem:[#allocation5 + $0x40] sm:$0xff]
        %v552 = vld [vmem:[#allocation5 + $0x48] sm:$0xff]
        %v553 = vld [vmem:[#allocation5 + $0x50] sm:$0xff]
        %v554 = vld [vmem:[#allocation5 + $0x58] sm:$0xff]
        %v555 = vld [vmem:[#allocation5 + $0x60] sm:$0xff]
        %v556 = vld [vmem:[#allocation5 + $0x68] sm:$0xff]
        %v557 = vld [vmem:[#allocation5 + $0x70] sm:$0xff]
        %v558 = vld [vmem:[#allocation5 + $0x78] sm:$0xff]
        %v559 = vld [vmem:[#allocation5 + $0x80] sm:$0xff]
        %v560 = vld [vmem:[#allocation5 + $0x88] sm:$0xff]
        %v561 = vld [vmem:[#allocation5 + $0x90] sm:$0xff]
        %v562 = vld [vmem:[#allocation5 + $0x98] sm:$0xff]
        %v563 = vld [vmem:[#allocation5 + $0xa0] sm:$0xff]
        %v564 = vld [vmem:[#allocation5 + $0xa8] sm:$0xff]
        %v565 = vld [vmem:[#allocation5 + $0xb0] sm:$0xff]
        %v566 = vld [vmem:[#allocation5 + $0xb8] sm:$0xff]
        %v567 = vld [vmem:[#allocation5 + $0xc0] sm:$0xff]
        %v568 = vld [vmem:[#allocation5 + $0xc8] sm:$0xff]
        %v569 = vld [vmem:[#allocation5 + $0xd0] sm:$0xff]
        %v570 = vld [vmem:[#allocation5 + $0xd8] sm:$0xff]
        %v571 = vld [vmem:[#allocation5 + $0xe0] sm:$0xff]
        %v572 = vld [vmem:[#allocation5 + $0xe8] sm:$0xff]
        %v573 = vld [vmem:[#allocation5 + $0xf0] sm:$0xff]
        %v574 = vld [vmem:[#allocation5 + $0xf8] sm:$0xff]
        %v575 = vld [vmem:[#allocation5 + $0x100] sm:$0xff]
        %v576 = vld [vmem:[#allocation5 + $0x108] sm:$0xff]
        %v577 = vld [vmem:[#allocation5 + $0x110] sm:$0xff]
        %v578 = vld [vmem:[#allocation5 + $0x118] sm:$0xff]
        %v579 = vld [vmem:[#allocation5 + $0x120] sm:$0xff]
        %v580 = vld [vmem:[#allocation5 + $0x128] sm:$0xff]
        %v581 = vld [vmem:[#allocation5 + $0x130] sm:$0xff]
        %v582 = vld [vmem:[#allocation5 + $0x138] sm:$0xff]
        %v583 = vld [vmem:[#allocation5 + $0x140] sm:$0xff]
        %v584 = vld [vmem:[#allocation5 + $0x148] sm:$0xff]
        %v585 = vld [vmem:[#allocation5 + $0x150] sm:$0xff]
        %v586 = vld [vmem:[#allocation5 + $0x158] sm:$0xff]
        %v587 = vld [vmem:[#allocation5 + $0x160] sm:$0xff]
        %v588 = vld [vmem:[#allocation5 + $0x168] sm:$0xff]
        %v589 = vld [vmem:[#allocation5 + $0x170] sm:$0xff]
        %v590 = vld [vmem:[#allocation5 + $0x178] sm:$0xff]
        %v591 = vld [vmem:[#allocation5 + $0x180] sm:$0xff]
        %v592 = vld [vmem:[#allocation5 + $0x188] sm:$0xff]
        %v593 = vld [vmem:[#allocation5 + $0x190] sm:$0xff]
        %v594 = vld [vmem:[#allocation5 + $0x198] sm:$0xff]
        %v595 = vld [vmem:[#allocation5 + $0x1a0] sm:$0xff]
        %v596 = vld [vmem:[#allocation5 + $0x1a8] sm:$0xff]
        %v597 = vld [vmem:[#allocation5 + $0x1b0] sm:$0xff]
        %v598 = vld [vmem:[#allocation5 + $0x1b8] sm:$0xff]
        %v599 = vld [vmem:[#allocation5 + $0x1c0] sm:$0xff]
        %v600 = vld [vmem:[#allocation5 + $0x1c8] sm:$0xff]
        %v601 = vld [vmem:[#allocation5 + $0x1d0] sm:$0xff]
        %v602 = vld [vmem:[#allocation5 + $0x1d8] sm:$0xff]
        %v603 = vld [vmem:[#allocation5 + $0x1e0] sm:$0xff]
        %v604 = vld [vmem:[#allocation5 + $0x1e8] sm:$0xff]
        %v605 = vld [vmem:[#allocation5 + $0x1f0] sm:$0xff]
        %v606 = vld [vmem:[#allocation5 + $0x1f8] sm:$0xff]
        %v607 = vld [vmem:[#allocation7] sm:$0x3]
        %v609 = vlaneseq
        %v610 = vshrl.u32 %v609, 7
        %v611 = vsub.s32 0, %v610
        %v612 = vrot.slane %v607, %v611
        %v613 = vlaneseq
        %v614 = vshrl.u32 %v613, 7
        %v615 = vsub.s32 1, %v614
        %v616 = vrot.slane %v607, %v615
        %v683 = vunpack.c.l.b16 %v543
        %v684 = vunpack.c.h.b16 %v543
        %v685 = vunpack.c.l.b16 %v544
        %v686 = vunpack.c.h.b16 %v544
        %v687 = vunpack.c.l.b16 %v545
        %v688 = vunpack.c.h.b16 %v545
        %v689 = vunpack.c.l.b16 %v546
        %v690 = vunpack.c.h.b16 %v546
        %v691 = vunpack.c.l.b16 %v547
        %v692 = vunpack.c.h.b16 %v547
        %v693 = vunpack.c.l.b16 %v548
        %v694 = vunpack.c.h.b16 %v548
        %v695 = vunpack.c.l.b16 %v549
        %v696 = vunpack.c.h.b16 %v549
        %v697 = vunpack.c.l.b16 %v550
        %v698 = vunpack.c.h.b16 %v550
        %v699 = vunpack.c.l.b16 %v551
        %v700 = vunpack.c.h.b16 %v551
        %v701 = vunpack.c.l.b16 %v552
        %v702 = vunpack.c.h.b16 %v552
        %v703 = vunpack.c.l.b16 %v553
        %v704 = vunpack.c.h.b16 %v553
        %v705 = vunpack.c.l.b16 %v554
        %v706 = vunpack.c.h.b16 %v554
        %v707 = vunpack.c.l.b16 %v555
        %v708 = vunpack.c.h.b16 %v555
        %v709 = vunpack.c.l.b16 %v556
        %v710 = vunpack.c.h.b16 %v556
        %v711 = vunpack.c.l.b16 %v557
        %v712 = vunpack.c.h.b16 %v557
        %v713 = vunpack.c.l.b16 %v558
        %v714 = vunpack.c.h.b16 %v558
        %v715 = vunpack.c.l.b16 %v559
        %v716 = vunpack.c.h.b16 %v559
        %v717 = vunpack.c.l.b16 %v560
        %v718 = vunpack.c.h.b16 %v560
        %v719 = vunpack.c.l.b16 %v561
        %v720 = vunpack.c.h.b16 %v561
        %v721 = vunpack.c.l.b16 %v562
        %v722 = vunpack.c.h.b16 %v562
        %v723 = vunpack.c.l.b16 %v563
        %v724 = vunpack.c.h.b16 %v563
        %v725 = vunpack.c.l.b16 %v564
        %v726 = vunpack.c.h.b16 %v564
        %v727 = vunpack.c.l.b16 %v565
        %v728 = vunpack.c.h.b16 %v565
        %v729 = vunpack.c.l.b16 %v566
        %v730 = vunpack.c.h.b16 %v566
        %v731 = vunpack.c.l.b16 %v567
        %v732 = vunpack.c.h.b16 %v567
        %v733 = vunpack.c.l.b16 %v568
        %v734 = vunpack.c.h.b16 %v568
        %v735 = vunpack.c.l.b16 %v569
        %v736 = vunpack.c.h.b16 %v569
        %v737 = vunpack.c.l.b16 %v570
        %v738 = vunpack.c.h.b16 %v570
        %v739 = vunpack.c.l.b16 %v571
        %v740 = vunpack.c.h.b16 %v571
        %v741 = vunpack.c.l.b16 %v572
        %v742 = vunpack.c.h.b16 %v572
        %v743 = vunpack.c.l.b16 %v573
        %v744 = vunpack.c.h.b16 %v573
        %v745 = vunpack.c.l.b16 %v574
        %v746 = vunpack.c.h.b16 %v574
        %v747 = vunpack.c.l.b16 %v575
        %v748 = vunpack.c.h.b16 %v575
        %v749 = vunpack.c.l.b16 %v576
        %v750 = vunpack.c.h.b16 %v576
        %v751 = vunpack.c.l.b16 %v577
        %v752 = vunpack.c.h.b16 %v577
        %v753 = vunpack.c.l.b16 %v578
        %v754 = vunpack.c.h.b16 %v578
        %v755 = vunpack.c.l.b16 %v579
        %v756 = vunpack.c.h.b16 %v579
        %v757 = vunpack.c.l.b16 %v580
        %v758 = vunpack.c.h.b16 %v580
        %v759 = vunpack.c.l.b16 %v581
        %v760 = vunpack.c.h.b16 %v581
        %v761 = vunpack.c.l.b16 %v582
        %v762 = vunpack.c.h.b16 %v582
        %v763 = vunpack.c.l.b16 %v583
        %v764 = vunpack.c.h.b16 %v583
        %v765 = vunpack.c.l.b16 %v584
        %v766 = vunpack.c.h.b16 %v584
        %v767 = vunpack.c.l.b16 %v585
        %v768 = vunpack.c.h.b16 %v585
        %v769 = vunpack.c.l.b16 %v586
        %v770 = vunpack.c.h.b16 %v586
        %v771 = vunpack.c.l.b16 %v587
        %v772 = vunpack.c.h.b16 %v587
        %v773 = vunpack.c.l.b16 %v588
        %v774 = vunpack.c.h.b16 %v588
        %v775 = vunpack.c.l.b16 %v589
        %v776 = vunpack.c.h.b16 %v589
        %v777 = vunpack.c.l.b16 %v590
        %v778 = vunpack.c.h.b16 %v590
        %v779 = vunpack.c.l.b16 %v591
        %v780 = vunpack.c.h.b16 %v591
        %v781 = vunpack.c.l.b16 %v592
        %v782 = vunpack.c.h.b16 %v592
        %v783 = vunpack.c.l.b16 %v593
        %v784 = vunpack.c.h.b16 %v593
        %v785 = vunpack.c.l.b16 %v594
        %v786 = vunpack.c.h.b16 %v594
        %v787 = vunpack.c.l.b16 %v595
        %v788 = vunpack.c.h.b16 %v595
        %v789 = vunpack.c.l.b16 %v596
        %v790 = vunpack.c.h.b16 %v596
        %v791 = vunpack.c.l.b16 %v597
        %v792 = vunpack.c.h.b16 %v597
        %v793 = vunpack.c.l.b16 %v598
        %v794 = vunpack.c.h.b16 %v598
        %v795 = vunpack.c.l.b16 %v599
        %v796 = vunpack.c.h.b16 %v599
        %v797 = vunpack.c.l.b16 %v600
        %v798 = vunpack.c.h.b16 %v600
        %v799 = vunpack.c.l.b16 %v601
        %v800 = vunpack.c.h.b16 %v601
        %v801 = vunpack.c.l.b16 %v602
        %v802 = vunpack.c.h.b16 %v602
        %v803 = vunpack.c.l.b16 %v603
        %v804 = vunpack.c.h.b16 %v603
        %v805 = vunpack.c.l.b16 %v604
        %v806 = vunpack.c.h.b16 %v604
        %v807 = vunpack.c.l.b16 %v605
        %v808 = vunpack.c.h.b16 %v605
        %v809 = vunpack.c.l.b16 %v606
        %v810 = vunpack.c.h.b16 %v606
        %v811 = vpack.c.b16 %v685, %v683
        %v812 = vpack.c.b16 %v686, %v684
        %v813 = vpack.c.b16 %v689, %v687
        %v814 = vpack.c.b16 %v690, %v688
        %v815 = vpack.c.b16 %v693, %v691
        %v816 = vpack.c.b16 %v694, %v692
        %v817 = vpack.c.b16 %v697, %v695
        %v818 = vpack.c.b16 %v698, %v696
        %v819 = vpack.c.b16 %v701, %v699
        %v820 = vpack.c.b16 %v702, %v700
        %v821 = vpack.c.b16 %v705, %v703
        %v822 = vpack.c.b16 %v706, %v704
        %v823 = vpack.c.b16 %v709, %v707
        %v824 = vpack.c.b16 %v710, %v708
        %v825 = vpack.c.b16 %v713, %v711
        %v826 = vpack.c.b16 %v714, %v712
        %v827 = vpack.c.b16 %v717, %v715
        %v828 = vpack.c.b16 %v718, %v716
        %v829 = vpack.c.b16 %v721, %v719
        %v830 = vpack.c.b16 %v722, %v720
        %v831 = vpack.c.b16 %v725, %v723
        %v832 = vpack.c.b16 %v726, %v724
        %v833 = vpack.c.b16 %v729, %v727
        %v834 = vpack.c.b16 %v730, %v728
        %v835 = vpack.c.b16 %v733, %v731
        %v836 = vpack.c.b16 %v734, %v732
        %v837 = vpack.c.b16 %v737, %v735
        %v838 = vpack.c.b16 %v738, %v736
        %v839 = vpack.c.b16 %v741, %v739
        %v840 = vpack.c.b16 %v742, %v740
        %v841 = vpack.c.b16 %v745, %v743
        %v842 = vpack.c.b16 %v746, %v744
        %v843 = vpack.c.b16 %v749, %v747
        %v844 = vpack.c.b16 %v750, %v748
        %v845 = vpack.c.b16 %v753, %v751
        %v846 = vpack.c.b16 %v754, %v752
        %v847 = vpack.c.b16 %v757, %v755
        %v848 = vpack.c.b16 %v758, %v756
        %v849 = vpack.c.b16 %v761, %v759
        %v850 = vpack.c.b16 %v762, %v760
        %v851 = vpack.c.b16 %v765, %v763
        %v852 = vpack.c.b16 %v766, %v764
        %v853 = vpack.c.b16 %v769, %v767
        %v854 = vpack.c.b16 %v770, %v768
        %v855 = vpack.c.b16 %v773, %v771
        %v856 = vpack.c.b16 %v774, %v772
        %v857 = vpack.c.b16 %v777, %v775
        %v858 = vpack.c.b16 %v778, %v776
        %v859 = vpack.c.b16 %v781, %v779
        %v860 = vpack.c.b16 %v782, %v780
        %v861 = vpack.c.b16 %v785, %v783
        %v862 = vpack.c.b16 %v786, %v784
        %v863 = vpack.c.b16 %v789, %v787
        %v864 = vpack.c.b16 %v790, %v788
        %v865 = vpack.c.b16 %v793, %v791
        %v866 = vpack.c.b16 %v794, %v792
        %v867 = vpack.c.b16 %v797, %v795
        %v868 = vpack.c.b16 %v798, %v796
        %v869 = vpack.c.b16 %v801, %v799
        %v870 = vpack.c.b16 %v802, %v800
        %v871 = vpack.c.b16 %v805, %v803
        %v872 = vpack.c.b16 %v806, %v804
        %v873 = vpack.c.b16 %v809, %v807
        %v874 = vpack.c.b16 %v810, %v808
        %939 = vmatprep.subr.bf16.mxu0 %v826
        %940 = vmatpush1.bf16.msra.mxu0 %v825
        %941 = vmatprep.subr.bf16.mxu0 %v824
        %942 = vmatpush1.bf16.msra.mxu0 %v823
        %943 = vmatprep.subr.bf16.mxu0 %v822
        %944 = vmatpush1.bf16.msra.mxu0 %v821
        %945 = vmatprep.subr.bf16.mxu0 %v820
        %946 = vmatpush1.bf16.msra.mxu0 %v819
        %947 = vmatprep.subr.bf16.mxu0 %v818
        %948 = vmatpush1.bf16.msra.mxu0 %v817
        %949 = vmatprep.subr.bf16.mxu0 %v816
        %950 = vmatpush1.bf16.msra.mxu0 %v815
        %951 = vmatprep.subr.bf16.mxu0 %v814
        %952 = vmatpush1.bf16.msra.mxu0 %v813
        %953 = vmatprep.subr.bf16.mxu0 %v812
        %954 = vmatpush1.bf16.msra.mxu0 %v811
        %955 = vmatprep.subr.bf16.mxu0 %v842
        %956 = vmatpush2.bf16.msra.mxu0 %v841
        %957 = vmatprep.subr.bf16.mxu0 %v840
        %958 = vmatpush2.bf16.msra.mxu0 %v839
        %959 = vmatprep.subr.bf16.mxu0 %v838
        %960 = vmatpush2.bf16.msra.mxu0 %v837
        %961 = vmatprep.subr.bf16.mxu0 %v836
        %962 = vmatpush2.bf16.msra.mxu0 %v835
        %963 = vmatprep.subr.bf16.mxu0 %v834
        %964 = vmatpush2.bf16.msra.mxu0 %v833
        %965 = vmatprep.subr.bf16.mxu0 %v832
        %966 = vmatpush2.bf16.msra.mxu0 %v831
        %967 = vmatprep.subr.bf16.mxu0 %v830
        %968 = vmatpush2.bf16.msra.mxu0 %v829
        %969 = vmatprep.subr.bf16.mxu0 %v828
        %970 = vmatpush2.bf16.msra.mxu0 %v827
        %971 = vmatprep.mubr.bf16.mxu0 %v468
        %972 = vmatmul.mubr.bf16.gmra.mxu0 %v467
        %v973 = vpop.f32.mrf.mxu0
        %v974 = vadd.f32 %v612, %v973
        %v975 = vpop.f32.mrf.mxu0
        %v976 = vadd.f32 %v616, %v975
        %v977 = vpop.f32.mrf.mxu0
        %v978 = vadd.f32 %v612, %v977
        %v979 = vpop.f32.mrf.mxu0
        %v980 = vadd.f32 %v616, %v979
        %981 = vmatprep.mubr.bf16.mxu0 %v472
        %982 = vmatmul.mubr.bf16.gmra.mxu0 %v471
        %v983 = vpop.f32.mrf.mxu0
        %v984 = vadd.f32 %v612, %v983
        %v985 = vpop.f32.mrf.mxu0
        %v986 = vadd.f32 %v616, %v985
        %v987 = vpop.f32.mrf.mxu0
        %v988 = vadd.f32 %v612, %v987
        %v989 = vpop.f32.mrf.mxu0
        %v990 = vadd.f32 %v616, %v989
        %991 = vmatprep.mubr.bf16.mxu0 %v476
        %992 = vmatmul.mubr.bf16.gmra.mxu0 %v475
        %v993 = vpop.f32.mrf.mxu0
        %v994 = vadd.f32 %v612, %v993
        %v995 = vpop.f32.mrf.mxu0
        %v996 = vadd.f32 %v616, %v995
        %v997 = vpop.f32.mrf.mxu0
        %v998 = vadd.f32 %v612, %v997
        %v999 = vpop.f32.mrf.mxu0
        %v1000 = vadd.f32 %v616, %v999
        %1001 = vmatprep.mubr.bf16.mxu0 %v480
        %1002 = vmatmul.mubr.bf16.gmra.mxu0 %v479
        %v1003 = vpop.f32.mrf.mxu0
        %v1004 = vadd.f32 %v612, %v1003
        %v1005 = vpop.f32.mrf.mxu0
        %v1006 = vadd.f32 %v616, %v1005
        %v1007 = vpop.f32.mrf.mxu0
        %v1008 = vadd.f32 %v612, %v1007
        %v1009 = vpop.f32.mrf.mxu0
        %v1010 = vadd.f32 %v616, %v1009
        %1011 = vmatprep.mubr.bf16.mxu0 %v484
        %1012 = vmatmul.mubr.bf16.gmra.mxu0 %v483
        %v1013 = vpop.f32.mrf.mxu0
        %v1014 = vadd.f32 %v612, %v1013
        %v1015 = vpop.f32.mrf.mxu0
        %v1016 = vadd.f32 %v616, %v1015
        %v1017 = vpop.f32.mrf.mxu0
        %v1018 = vadd.f32 %v612, %v1017
        %v1019 = vpop.f32.mrf.mxu0
        %v1020 = vadd.f32 %v616, %v1019
        %1021 = vmatprep.mubr.bf16.mxu0 %v488
        %1022 = vmatmul.mubr.bf16.gmra.mxu0 %v487
        %v1023 = vpop.f32.mrf.mxu0
        %v1024 = vadd.f32 %v612, %v1023
        %v1025 = vpop.f32.mrf.mxu0
        %v1026 = vadd.f32 %v616, %v1025
        %v1027 = vpop.f32.mrf.mxu0
        %v1028 = vadd.f32 %v612, %v1027
        %v1029 = vpop.f32.mrf.mxu0
        %v1030 = vadd.f32 %v616, %v1029
        %1031 = vmatprep.mubr.bf16.mxu0 %v492
        %1032 = vmatmul.mubr.bf16.gmra.mxu0 %v491
        %v1033 = vpop.f32.mrf.mxu0
        %v1034 = vadd.f32 %v612, %v1033
        %v1035 = vpop.f32.mrf.mxu0
        %v1036 = vadd.f32 %v616, %v1035
        %v1037 = vpop.f32.mrf.mxu0
        %v1038 = vadd.f32 %v612, %v1037
        %v1039 = vpop.f32.mrf.mxu0
        %v1040 = vadd.f32 %v616, %v1039
        %1041 = vmatprep.mubr.bf16.mxu0 %v496
        %1042 = vmatmul.mubr.bf16.gmra.mxu0 %v495
        %v1043 = vpop.f32.mrf.mxu0
        %v1044 = vadd.f32 %v612, %v1043
        %v1045 = vpop.f32.mrf.mxu0
        %v1046 = vadd.f32 %v616, %v1045
        %v1047 = vpop.f32.mrf.mxu0
        %v1048 = vadd.f32 %v612, %v1047
        %v1049 = vpop.f32.mrf.mxu0
        %v1050 = vadd.f32 %v616, %v1049
        %1051 = vmatprep.mubr.bf16.mxu0 %v500
        %1052 = vmatmul.mubr.bf16.gmra.mxu0 %v499
        %v1053 = vpop.f32.mrf.mxu0
        %v1054 = vadd.f32 %v612, %v1053
        %v1055 = vpop.f32.mrf.mxu0
        %v1056 = vadd.f32 %v616, %v1055
        %v1057 = vpop.f32.mrf.mxu0
        %v1058 = vadd.f32 %v612, %v1057
        %v1059 = vpop.f32.mrf.mxu0
        %v1060 = vadd.f32 %v616, %v1059
        %1061 = vmatprep.mubr.bf16.mxu0 %v504
        %1062 = vmatmul.mubr.bf16.gmra.mxu0 %v503
        %v1063 = vpop.f32.mrf.mxu0
        %v1064 = vadd.f32 %v612, %v1063
        %v1065 = vpop.f32.mrf.mxu0
        %v1066 = vadd.f32 %v616, %v1065
        %v1067 = vpop.f32.mrf.mxu0
        %v1068 = vadd.f32 %v612, %v1067
        %v1069 = vpop.f32.mrf.mxu0
        %v1070 = vadd.f32 %v616, %v1069
        %1071 = vmatprep.mubr.bf16.mxu0 %v508
        %1072 = vmatmul.mubr.bf16.gmra.mxu0 %v507
        %v1073 = vpop.f32.mrf.mxu0
        %v1074 = vadd.f32 %v612, %v1073
        %v1075 = vpop.f32.mrf.mxu0
        %v1076 = vadd.f32 %v616, %v1075
        %v1077 = vpop.f32.mrf.mxu0
        %v1078 = vadd.f32 %v612, %v1077
        %v1079 = vpop.f32.mrf.mxu0
        %v1080 = vadd.f32 %v616, %v1079
        %1081 = vmatprep.mubr.bf16.mxu0 %v512
        %1082 = vmatmul.mubr.bf16.gmra.mxu0 %v511
        %v1083 = vpop.f32.mrf.mxu0
        %v1084 = vadd.f32 %v612, %v1083
        %v1085 = vpop.f32.mrf.mxu0
        %v1086 = vadd.f32 %v616, %v1085
        %v1087 = vpop.f32.mrf.mxu0
        %v1088 = vadd.f32 %v612, %v1087
        %v1089 = vpop.f32.mrf.mxu0
        %v1090 = vadd.f32 %v616, %v1089
        %1091 = vmatprep.mubr.bf16.mxu0 %v516
        %1092 = vmatmul.mubr.bf16.gmra.mxu0 %v515
        %v1093 = vpop.f32.mrf.mxu0
        %v1094 = vadd.f32 %v612, %v1093
        %v1095 = vpop.f32.mrf.mxu0
        %v1096 = vadd.f32 %v616, %v1095
        %v1097 = vpop.f32.mrf.mxu0
        %v1098 = vadd.f32 %v612, %v1097
        %v1099 = vpop.f32.mrf.mxu0
        %v1100 = vadd.f32 %v616, %v1099
        %1101 = vmatprep.mubr.bf16.mxu0 %v520
        %1102 = vmatmul.mubr.bf16.gmra.mxu0 %v519
        %v1103 = vpop.f32.mrf.mxu0
        %v1104 = vadd.f32 %v612, %v1103
        %v1105 = vpop.f32.mrf.mxu0
        %v1106 = vadd.f32 %v616, %v1105
        %v1107 = vpop.f32.mrf.mxu0
        %v1108 = vadd.f32 %v612, %v1107
        %v1109 = vpop.f32.mrf.mxu0
        %v1110 = vadd.f32 %v616, %v1109
        %1111 = vmatprep.mubr.bf16.mxu0 %v524
        %1112 = vmatmul.mubr.bf16.gmra.mxu0 %v523
        %v1113 = vpop.f32.mrf.mxu0
        %v1114 = vadd.f32 %v612, %v1113
        %v1115 = vpop.f32.mrf.mxu0
        %v1116 = vadd.f32 %v616, %v1115
        %v1117 = vpop.f32.mrf.mxu0
        %v1118 = vadd.f32 %v612, %v1117
        %v1119 = vpop.f32.mrf.mxu0
        %v1120 = vadd.f32 %v616, %v1119
        %1121 = vmatprep.mubr.bf16.mxu0 %v528
        %1122 = vmatmul.mubr.bf16.gmra.mxu0 %v527
        %v1123 = vpop.f32.mrf.mxu0
        %v1124 = vadd.f32 %v612, %v1123
        %v1125 = vpop.f32.mrf.mxu0
        %v1126 = vadd.f32 %v616, %v1125
        %v1127 = vpop.f32.mrf.mxu0
        %v1128 = vadd.f32 %v612, %v1127
        %v1129 = vpop.f32.mrf.mxu0
        %v1130 = vadd.f32 %v616, %v1129
        %1131 = vmatprep.mubr.bf16.mxu0 %v532
        %1132 = vmatmul.mubr.bf16.gmra.mxu0 %v531
        %v1133 = vpop.f32.mrf.mxu0
        %v1134 = vadd.f32 %v612, %v1133
        %v1135 = vpop.f32.mrf.mxu0
        %v1136 = vadd.f32 %v616, %v1135
        %v1137 = vpop.f32.mrf.mxu0
        %v1138 = vadd.f32 %v612, %v1137
        %v1139 = vpop.f32.mrf.mxu0
        %v1140 = vadd.f32 %v616, %v1139
        %1141 = vmatprep.mubr.bf16.mxu0 %v536
        %1142 = vmatmul.mubr.bf16.gmra.mxu0 %v535
        %v1143 = vpop.f32.mrf.mxu0
        %v1144 = vadd.f32 %v612, %v1143
        %v1145 = vpop.f32.mrf.mxu0
        %v1146 = vadd.f32 %v616, %v1145
        %v1147 = vpop.f32.mrf.mxu0
        %v1148 = vadd.f32 %v612, %v1147
        %v1149 = vpop.f32.mrf.mxu0
        %v1150 = vadd.f32 %v616, %v1149
        %1151 = vmatprep.mubr.bf16.mxu0 %v540
        %1152 = vmatmul.mubr.bf16.gmra.mxu0 %v539
        %v1153 = vpop.f32.mrf.mxu0
        %v1154 = vadd.f32 %v612, %v1153
        %v1155 = vpop.f32.mrf.mxu0
        %v1156 = vadd.f32 %v616, %v1155
        %v1157 = vpop.f32.mrf.mxu0
        %v1158 = vadd.f32 %v612, %v1157
        %v1159 = vpop.f32.mrf.mxu0
        %v1160 = vadd.f32 %v616, %v1159
        %1161 = vdwg.mxu0
        %1162 = vmatprep.subr.bf16.mxu0 %v858
        %1163 = vmatpush1.bf16.msra.mxu0 %v857
        %1164 = vmatprep.subr.bf16.mxu0 %v856
        %1165 = vmatpush1.bf16.msra.mxu0 %v855
        %1166 = vmatprep.subr.bf16.mxu0 %v854
        %1167 = vmatpush1.bf16.msra.mxu0 %v853
        %1168 = vmatprep.subr.bf16.mxu0 %v852
        %1169 = vmatpush1.bf16.msra.mxu0 %v851
        %1170 = vmatprep.subr.bf16.mxu0 %v850
        %1171 = vmatpush1.bf16.msra.mxu0 %v849
        %1172 = vmatprep.subr.bf16.mxu0 %v848
        %1173 = vmatpush1.bf16.msra.mxu0 %v847
        %1174 = vmatprep.subr.bf16.mxu0 %v846
        %1175 = vmatpush1.bf16.msra.mxu0 %v845
        %1176 = vmatprep.subr.bf16.mxu0 %v844
        %1177 = vmatpush1.bf16.msra.mxu0 %v843
        %1178 = vmatprep.subr.bf16.mxu0 %v874
        %1179 = vmatpush2.bf16.msra.mxu0 %v873
        %1180 = vmatprep.subr.bf16.mxu0 %v872
        %1181 = vmatpush2.bf16.msra.mxu0 %v871
        %1182 = vmatprep.subr.bf16.mxu0 %v870
        %1183 = vmatpush2.bf16.msra.mxu0 %v869
        %1184 = vmatprep.subr.bf16.mxu0 %v868
        %1185 = vmatpush2.bf16.msra.mxu0 %v867
        %1186 = vmatprep.subr.bf16.mxu0 %v866
        %1187 = vmatpush2.bf16.msra.mxu0 %v865
        %1188 = vmatprep.subr.bf16.mxu0 %v864
        %1189 = vmatpush2.bf16.msra.mxu0 %v863
        %1190 = vmatprep.subr.bf16.mxu0 %v862
        %1191 = vmatpush2.bf16.msra.mxu0 %v861
        %1192 = vmatprep.subr.bf16.mxu0 %v860
        %1193 = vmatpush2.bf16.msra.mxu0 %v859
        %1194 = vmatprep.mubr.bf16.mxu0 %v470
        %1195 = vmatmul.mubr.bf16.gmra.mxu0 %v469
        %v1196 = vpop.f32.mrf.mxu0
        %v1197 = vadd.f32 %v974, %v1196
        %v1198 = vpop.f32.mrf.mxu0
        %v1199 = vadd.f32 %v976, %v1198
        %v1200 = vpop.f32.mrf.mxu0
        %v1201 = vadd.f32 %v978, %v1200
        %v1202 = vpop.f32.mrf.mxu0
        %v1203 = vadd.f32 %v980, %v1202
        %1204 = vmatprep.mubr.bf16.mxu0 %v474
        %1205 = vmatmul.mubr.bf16.gmra.mxu0 %v473
        %v1206 = vpop.f32.mrf.mxu0
        %v1207 = vadd.f32 %v984, %v1206
        %v1208 = vpop.f32.mrf.mxu0
        %v1209 = vadd.f32 %v986, %v1208
        %v1210 = vpop.f32.mrf.mxu0
        %v1211 = vadd.f32 %v988, %v1210
        %v1212 = vpop.f32.mrf.mxu0
        %v1213 = vadd.f32 %v990, %v1212
        %1214 = vmatprep.mubr.bf16.mxu0 %v478
        %1215 = vmatmul.mubr.bf16.gmra.mxu0 %v477
        %v1216 = vpop.f32.mrf.mxu0
        %v1217 = vadd.f32 %v994, %v1216
        %v1218 = vpop.f32.mrf.mxu0
        %v1219 = vadd.f32 %v996, %v1218
        %v1220 = vpop.f32.mrf.mxu0
        %v1221 = vadd.f32 %v998, %v1220
        %v1222 = vpop.f32.mrf.mxu0
        %v1223 = vadd.f32 %v1000, %v1222
        %1224 = vmatprep.mubr.bf16.mxu0 %v482
        %1225 = vmatmul.mubr.bf16.gmra.mxu0 %v481
        %v1226 = vpop.f32.mrf.mxu0
        %v1227 = vadd.f32 %v1004, %v1226
        %v1228 = vpop.f32.mrf.mxu0
        %v1229 = vadd.f32 %v1006, %v1228
        %v1230 = vpop.f32.mrf.mxu0
        %v1231 = vadd.f32 %v1008, %v1230
        %v1232 = vpop.f32.mrf.mxu0
        %v1233 = vadd.f32 %v1010, %v1232
        %1234 = vmatprep.mubr.bf16.mxu0 %v486
        %1235 = vmatmul.mubr.bf16.gmra.mxu0 %v485
        %v1236 = vpop.f32.mrf.mxu0
        %v1237 = vadd.f32 %v1014, %v1236
        %v1238 = vpop.f32.mrf.mxu0
        %v1239 = vadd.f32 %v1016, %v1238
        %v1240 = vpop.f32.mrf.mxu0
        %v1241 = vadd.f32 %v1018, %v1240
        %v1242 = vpop.f32.mrf.mxu0
        %v1243 = vadd.f32 %v1020, %v1242
        %1244 = vmatprep.mubr.bf16.mxu0 %v490
        %1245 = vmatmul.mubr.bf16.gmra.mxu0 %v489
        %v1246 = vpop.f32.mrf.mxu0
        %v1247 = vadd.f32 %v1024, %v1246
        %v1248 = vpop.f32.mrf.mxu0
        %v1249 = vadd.f32 %v1026, %v1248
        %v1250 = vpop.f32.mrf.mxu0
        %v1251 = vadd.f32 %v1028, %v1250
        %v1252 = vpop.f32.mrf.mxu0
        %v1253 = vadd.f32 %v1030, %v1252
        %1254 = vmatprep.mubr.bf16.mxu0 %v494
        %1255 = vmatmul.mubr.bf16.gmra.mxu0 %v493
        %v1256 = vpop.f32.mrf.mxu0
        %v1257 = vadd.f32 %v1034, %v1256
        %v1258 = vpop.f32.mrf.mxu0
        %v1259 = vadd.f32 %v1036, %v1258
        %v1260 = vpop.f32.mrf.mxu0
        %v1261 = vadd.f32 %v1038, %v1260
        %v1262 = vpop.f32.mrf.mxu0
        %v1263 = vadd.f32 %v1040, %v1262
        %1264 = vmatprep.mubr.bf16.mxu0 %v498
        %1265 = vmatmul.mubr.bf16.gmra.mxu0 %v497
        %v1266 = vpop.f32.mrf.mxu0
        %v1267 = vadd.f32 %v1044, %v1266
        %v1268 = vpop.f32.mrf.mxu0
        %v1269 = vadd.f32 %v1046, %v1268
        %v1270 = vpop.f32.mrf.mxu0
        %v1271 = vadd.f32 %v1048, %v1270
        %v1272 = vpop.f32.mrf.mxu0
        %v1273 = vadd.f32 %v1050, %v1272
        %1274 = vmatprep.mubr.bf16.mxu0 %v502
        %1275 = vmatmul.mubr.bf16.gmra.mxu0 %v501
        %v1276 = vpop.f32.mrf.mxu0
        %v1277 = vadd.f32 %v1054, %v1276
        %v1278 = vpop.f32.mrf.mxu0
        %v1279 = vadd.f32 %v1056, %v1278
        %v1280 = vpop.f32.mrf.mxu0
        %v1281 = vadd.f32 %v1058, %v1280
        %v1282 = vpop.f32.mrf.mxu0
        %v1283 = vadd.f32 %v1060, %v1282
        %1284 = vmatprep.mubr.bf16.mxu0 %v506
        %1285 = vmatmul.mubr.bf16.gmra.mxu0 %v505
        %v1286 = vpop.f32.mrf.mxu0
        %v1287 = vadd.f32 %v1064, %v1286
        %v1288 = vpop.f32.mrf.mxu0
        %v1289 = vadd.f32 %v1066, %v1288
        %v1290 = vpop.f32.mrf.mxu0
        %v1291 = vadd.f32 %v1068, %v1290
        %v1292 = vpop.f32.mrf.mxu0
        %v1293 = vadd.f32 %v1070, %v1292
        %1294 = vmatprep.mubr.bf16.mxu0 %v510
        %1295 = vmatmul.mubr.bf16.gmra.mxu0 %v509
        %v1296 = vpop.f32.mrf.mxu0
        %v1297 = vadd.f32 %v1074, %v1296
        %v1298 = vpop.f32.mrf.mxu0
        %v1299 = vadd.f32 %v1076, %v1298
        %v1300 = vpop.f32.mrf.mxu0
        %v1301 = vadd.f32 %v1078, %v1300
        %v1302 = vpop.f32.mrf.mxu0
        %v1303 = vadd.f32 %v1080, %v1302
        %1304 = vmatprep.mubr.bf16.mxu0 %v514
        %1305 = vmatmul.mubr.bf16.gmra.mxu0 %v513
        %v1306 = vpop.f32.mrf.mxu0
        %v1307 = vadd.f32 %v1084, %v1306
        %v1308 = vpop.f32.mrf.mxu0
        %v1309 = vadd.f32 %v1086, %v1308
        %v1310 = vpop.f32.mrf.mxu0
        %v1311 = vadd.f32 %v1088, %v1310
        %v1312 = vpop.f32.mrf.mxu0
        %v1313 = vadd.f32 %v1090, %v1312
        %1314 = vmatprep.mubr.bf16.mxu0 %v518
        %1315 = vmatmul.mubr.bf16.gmra.mxu0 %v517
        %v1316 = vpop.f32.mrf.mxu0
        %v1317 = vadd.f32 %v1094, %v1316
        %v1318 = vpop.f32.mrf.mxu0
        %v1319 = vadd.f32 %v1096, %v1318
        %v1320 = vpop.f32.mrf.mxu0
        %v1321 = vadd.f32 %v1098, %v1320
        %v1322 = vpop.f32.mrf.mxu0
        %v1323 = vadd.f32 %v1100, %v1322
        %1324 = vmatprep.mubr.bf16.mxu0 %v522
        %1325 = vmatmul.mubr.bf16.gmra.mxu0 %v521
        %v1326 = vpop.f32.mrf.mxu0
        %v1327 = vadd.f32 %v1104, %v1326
        %v1328 = vpop.f32.mrf.mxu0
        %v1329 = vadd.f32 %v1106, %v1328
        %v1330 = vpop.f32.mrf.mxu0
        %v1331 = vadd.f32 %v1108, %v1330
        %v1332 = vpop.f32.mrf.mxu0
        %v1333 = vadd.f32 %v1110, %v1332
        %1334 = vmatprep.mubr.bf16.mxu0 %v526
        %1335 = vmatmul.mubr.bf16.gmra.mxu0 %v525
        %v1336 = vpop.f32.mrf.mxu0
        %v1337 = vadd.f32 %v1114, %v1336
        %v1338 = vpop.f32.mrf.mxu0
        %v1339 = vadd.f32 %v1116, %v1338
        %v1340 = vpop.f32.mrf.mxu0
        %v1341 = vadd.f32 %v1118, %v1340
        %v1342 = vpop.f32.mrf.mxu0
        %v1343 = vadd.f32 %v1120, %v1342
        %1344 = vmatprep.mubr.bf16.mxu0 %v530
        %1345 = vmatmul.mubr.bf16.gmra.mxu0 %v529
        %v1346 = vpop.f32.mrf.mxu0
        %v1347 = vadd.f32 %v1124, %v1346
        %v1348 = vpop.f32.mrf.mxu0
        %v1349 = vadd.f32 %v1126, %v1348
        %v1350 = vpop.f32.mrf.mxu0
        %v1351 = vadd.f32 %v1128, %v1350
        %v1352 = vpop.f32.mrf.mxu0
        %v1353 = vadd.f32 %v1130, %v1352
        %1354 = vmatprep.mubr.bf16.mxu0 %v534
        %1355 = vmatmul.mubr.bf16.gmra.mxu0 %v533
        %v1356 = vpop.f32.mrf.mxu0
        %v1357 = vadd.f32 %v1134, %v1356
        %v1358 = vpop.f32.mrf.mxu0
        %v1359 = vadd.f32 %v1136, %v1358
        %v1360 = vpop.f32.mrf.mxu0
        %v1361 = vadd.f32 %v1138, %v1360
        %v1362 = vpop.f32.mrf.mxu0
        %v1363 = vadd.f32 %v1140, %v1362
        %1364 = vmatprep.mubr.bf16.mxu0 %v538
        %1365 = vmatmul.mubr.bf16.gmra.mxu0 %v537
        %v1366 = vpop.f32.mrf.mxu0
        %v1367 = vadd.f32 %v1144, %v1366
        %v1368 = vpop.f32.mrf.mxu0
        %v1369 = vadd.f32 %v1146, %v1368
        %v1370 = vpop.f32.mrf.mxu0
        %v1371 = vadd.f32 %v1148, %v1370
        %v1372 = vpop.f32.mrf.mxu0
        %v1373 = vadd.f32 %v1150, %v1372
        %1374 = vmatprep.mubr.bf16.mxu0 %v542
        %1375 = vmatmul.mubr.bf16.gmra.mxu0 %v541
        %v1376 = vpop.f32.mrf.mxu0
        %v1377 = vadd.f32 %v1154, %v1376
        %v1378 = vpop.f32.mrf.mxu0
        %v1379 = vadd.f32 %v1156, %v1378
        %v1380 = vpop.f32.mrf.mxu0
        %v1381 = vadd.f32 %v1158, %v1380
        %v1382 = vpop.f32.mrf.mxu0
        %v1383 = vadd.f32 %v1160, %v1382
        %1384 = vdwg.mxu0
        %v1385 = vld [vmem:[#allocation8] sm:$0x3]
        %v1386 = vld [vmem:[#allocation10] sm:$0x3]
        %v1387 = vadd.f32 %v1197, %v1199
        %1388 = vadd.xlane.f32.xlu0 %v1387
        %v1389 = vpop.xlane.xlu0 %1388
        %v1390 = vadd.f32 %v1201, %v1203
        %1391 = vadd.xlane.f32.xlu0 %v1390
        %v1392 = vpop.xlane.xlu0 %1391
        %v1393 = vadd.f32 %v1207, %v1209
        %1394 = vadd.xlane.f32.xlu0 %v1393
        %v1395 = vpop.xlane.xlu0 %1394
        %v1396 = vadd.f32 %v1211, %v1213
        %1397 = vadd.xlane.f32.xlu0 %v1396
        %v1398 = vpop.xlane.xlu0 %1397
        %v1399 = vadd.f32 %v1217, %v1219
        %1400 = vadd.xlane.f32.xlu0 %v1399
        %v1401 = vpop.xlane.xlu0 %1400
        %v1402 = vadd.f32 %v1221, %v1223
        %1403 = vadd.xlane.f32.xlu0 %v1402
        %v1404 = vpop.xlane.xlu0 %1403
        %v1405 = vadd.f32 %v1227, %v1229
        %1406 = vadd.xlane.f32.xlu0 %v1405
        %v1407 = vpop.xlane.xlu0 %1406
        %v1408 = vadd.f32 %v1231, %v1233
        %1409 = vadd.xlane.f32.xlu0 %v1408
        %v1410 = vpop.xlane.xlu0 %1409
        %v1411 = vadd.f32 %v1237, %v1239
        %1412 = vadd.xlane.f32.xlu0 %v1411
        %v1413 = vpop.xlane.xlu0 %1412
        %v1414 = vadd.f32 %v1241, %v1243
        %1415 = vadd.xlane.f32.xlu0 %v1414
        %v1416 = vpop.xlane.xlu0 %1415
        %v1417 = vadd.f32 %v1247, %v1249
        %1418 = vadd.xlane.f32.xlu0 %v1417
        %v1419 = vpop.xlane.xlu0 %1418
        %v1420 = vadd.f32 %v1251, %v1253
        %1421 = vadd.xlane.f32.xlu0 %v1420
        %v1422 = vpop.xlane.xlu0 %1421
        %v1423 = vadd.f32 %v1257, %v1259
        %1424 = vadd.xlane.f32.xlu0 %v1423
        %v1425 = vpop.xlane.xlu0 %1424
        %v1426 = vadd.f32 %v1261, %v1263
        %1427 = vadd.xlane.f32.xlu0 %v1426
        %v1428 = vpop.xlane.xlu0 %1427
        %v1429 = vadd.f32 %v1267, %v1269
        %1430 = vadd.xlane.f32.xlu0 %v1429
        %v1431 = vpop.xlane.xlu0 %1430
        %v1432 = vadd.f32 %v1271, %v1273
        %1433 = vadd.xlane.f32.xlu0 %v1432
        %v1434 = vpop.xlane.xlu0 %1433
        %v1435 = vadd.f32 %v1277, %v1279
        %1436 = vadd.xlane.f32.xlu0 %v1435
        %v1437 = vpop.xlane.xlu0 %1436
        %v1438 = vadd.f32 %v1281, %v1283
        %1439 = vadd.xlane.f32.xlu0 %v1438
        %v1440 = vpop.xlane.xlu0 %1439
        %v1441 = vadd.f32 %v1287, %v1289
        %1442 = vadd.xlane.f32.xlu0 %v1441
        %v1443 = vpop.xlane.xlu0 %1442
        %v1444 = vadd.f32 %v1291, %v1293
        %1445 = vadd.xlane.f32.xlu0 %v1444
        %v1446 = vpop.xlane.xlu0 %1445
        %v1447 = vadd.f32 %v1297, %v1299
        %1448 = vadd.xlane.f32.xlu0 %v1447
        %v1449 = vpop.xlane.xlu0 %1448
        %v1450 = vadd.f32 %v1301, %v1303
        %1451 = vadd.xlane.f32.xlu0 %v1450
        %v1452 = vpop.xlane.xlu0 %1451
        %v1453 = vadd.f32 %v1307, %v1309
        %1454 = vadd.xlane.f32.xlu0 %v1453
        %v1455 = vpop.xlane.xlu0 %1454
        %v1456 = vadd.f32 %v1311, %v1313
        %1457 = vadd.xlane.f32.xlu0 %v1456
        %v1458 = vpop.xlane.xlu0 %1457
        %v1459 = vadd.f32 %v1317, %v1319
        %1460 = vadd.xlane.f32.xlu0 %v1459
        %v1461 = vpop.xlane.xlu0 %1460
        %v1462 = vadd.f32 %v1321, %v1323
        %1463 = vadd.xlane.f32.xlu0 %v1462
        %v1464 = vpop.xlane.xlu0 %1463
        %v1465 = vadd.f32 %v1327, %v1329
        %1466 = vadd.xlane.f32.xlu0 %v1465
        %v1467 = vpop.xlane.xlu0 %1466
        %v1468 = vadd.f32 %v1331, %v1333
        %1469 = vadd.xlane.f32.xlu0 %v1468
        %v1470 = vpop.xlane.xlu0 %1469
        %v1471 = vadd.f32 %v1337, %v1339
        %1472 = vadd.xlane.f32.xlu0 %v1471
        %v1473 = vpop.xlane.xlu0 %1472
        %v1474 = vadd.f32 %v1341, %v1343
        %1475 = vadd.xlane.f32.xlu0 %v1474
        %v1476 = vpop.xlane.xlu0 %1475
        %v1477 = vadd.f32 %v1347, %v1349
        %1478 = vadd.xlane.f32.xlu0 %v1477
        %v1479 = vpop.xlane.xlu0 %1478
        %v1480 = vadd.f32 %v1351, %v1353
        %1481 = vadd.xlane.f32.xlu0 %v1480
        %v1482 = vpop.xlane.xlu0 %1481
        %v1483 = vadd.f32 %v1357, %v1359
        %1484 = vadd.xlane.f32.xlu0 %v1483
        %v1485 = vpop.xlane.xlu0 %1484
        %v1486 = vadd.f32 %v1361, %v1363
        %1487 = vadd.xlane.f32.xlu0 %v1486
        %v1488 = vpop.xlane.xlu0 %1487
        %v1489 = vadd.f32 %v1367, %v1369
        %1490 = vadd.xlane.f32.xlu0 %v1489
        %v1491 = vpop.xlane.xlu0 %1490
        %v1492 = vadd.f32 %v1371, %v1373
        %1493 = vadd.xlane.f32.xlu0 %v1492
        %v1494 = vpop.xlane.xlu0 %1493
        %v1495 = vadd.f32 %v1377, %v1379
        %1496 = vadd.xlane.f32.xlu0 %v1495
        %v1497 = vpop.xlane.xlu0 %1496
        %v1498 = vadd.f32 %v1381, %v1383
        %1499 = vadd.xlane.f32.xlu0 %v1498
        %v1500 = vpop.xlane.xlu0 %1499
        %v1501 = vrcp.pop 256.0
        %v1502 = vmul.f32 %v1389, %v1501
        %v1503 = vmul.f32 %v1392, %v1501
        %v1504 = vmul.f32 %v1395, %v1501
        %v1505 = vmul.f32 %v1398, %v1501
        %v1506 = vmul.f32 %v1401, %v1501
        %v1507 = vmul.f32 %v1404, %v1501
        %v1508 = vmul.f32 %v1407, %v1501
        %v1509 = vmul.f32 %v1410, %v1501
        %v1510 = vmul.f32 %v1413, %v1501
        %v1511 = vmul.f32 %v1416, %v1501
        %v1512 = vmul.f32 %v1419, %v1501
        %v1513 = vmul.f32 %v1422, %v1501
        %v1514 = vmul.f32 %v1425, %v1501
        %v1515 = vmul.f32 %v1428, %v1501
        %v1516 = vmul.f32 %v1431, %v1501
        %v1517 = vmul.f32 %v1434, %v1501
        %v1518 = vmul.f32 %v1437, %v1501
        %v1519 = vmul.f32 %v1440, %v1501
        %v1520 = vmul.f32 %v1443, %v1501
        %v1521 = vmul.f32 %v1446, %v1501
        %v1522 = vmul.f32 %v1449, %v1501
        %v1523 = vmul.f32 %v1452, %v1501
        %v1524 = vmul.f32 %v1455, %v1501
        %v1525 = vmul.f32 %v1458, %v1501
        %v1526 = vmul.f32 %v1461, %v1501
        %v1527 = vmul.f32 %v1464, %v1501
        %v1528 = vmul.f32 %v1467, %v1501
        %v1529 = vmul.f32 %v1470, %v1501
        %v1530 = vmul.f32 %v1473, %v1501
        %v1531 = vmul.f32 %v1476, %v1501
        %v1532 = vmul.f32 %v1479, %v1501
        %v1533 = vmul.f32 %v1482, %v1501
        %v1534 = vmul.f32 %v1485, %v1501
        %v1535 = vmul.f32 %v1488, %v1501
        %v1536 = vmul.f32 %v1491, %v1501
        %v1537 = vmul.f32 %v1494, %v1501
        %v1538 = vmul.f32 %v1497, %v1501
        %v1539 = vmul.f32 %v1500, %v1501
        %v1540 = vmul.f32 %v1197, %v1197
        %v1541 = vmul.f32 %v1199, %v1199
        %v1542 = vmul.f32 %v1201, %v1201
        %v1543 = vmul.f32 %v1203, %v1203
        %v1544 = vmul.f32 %v1207, %v1207
        %v1545 = vmul.f32 %v1209, %v1209
        %v1546 = vmul.f32 %v1211, %v1211
        %v1547 = vmul.f32 %v1213, %v1213
        %v1548 = vmul.f32 %v1217, %v1217
        %v1549 = vmul.f32 %v1219, %v1219
        %v1550 = vmul.f32 %v1221, %v1221
        %v1551 = vmul.f32 %v1223, %v1223
        %v1552 = vmul.f32 %v1227, %v1227
        %v1553 = vmul.f32 %v1229, %v1229
        %v1554 = vmul.f32 %v1231, %v1231
        %v1555 = vmul.f32 %v1233, %v1233
        %v1556 = vmul.f32 %v1237, %v1237
        %v1557 = vmul.f32 %v1239, %v1239
        %v1558 = vmul.f32 %v1241, %v1241
        %v1559 = vmul.f32 %v1243, %v1243
        %v1560 = vmul.f32 %v1247, %v1247
        %v1561 = vmul.f32 %v1249, %v1249
        %v1562 = vmul.f32 %v1251, %v1251
        %v1563 = vmul.f32 %v1253, %v1253
        %v1564 = vmul.f32 %v1257, %v1257
        %v1565 = vmul.f32 %v1259, %v1259
        %v1566 = vmul.f32 %v1261, %v1261
        %v1567 = vmul.f32 %v1263, %v1263
        %v1568 = vmul.f32 %v1267, %v1267
        %v1569 = vmul.f32 %v1269, %v1269
        %v1570 = vmul.f32 %v1271, %v1271
        %v1571 = vmul.f32 %v1273, %v1273
        %v1572 = vmul.f32 %v1277, %v1277
        %v1573 = vmul.f32 %v1279, %v1279
        %v1574 = vmul.f32 %v1281, %v1281
        %v1575 = vmul.f32 %v1283, %v1283
        %v1576 = vmul.f32 %v1287, %v1287
        %v1577 = vmul.f32 %v1289, %v1289
        %v1578 = vmul.f32 %v1291, %v1291
        %v1579 = vmul.f32 %v1293, %v1293
        %v1580 = vmul.f32 %v1297, %v1297
        %v1581 = vmul.f32 %v1299, %v1299
        %v1582 = vmul.f32 %v1301, %v1301
        %v1583 = vmul.f32 %v1303, %v1303
        %v1584 = vmul.f32 %v1307, %v1307
        %v1585 = vmul.f32 %v1309, %v1309
        %v1586 = vmul.f32 %v1311, %v1311
        %v1587 = vmul.f32 %v1313, %v1313
        %v1588 = vmul.f32 %v1317, %v1317
        %v1589 = vmul.f32 %v1319, %v1319
        %v1590 = vmul.f32 %v1321, %v1321
        %v1591 = vmul.f32 %v1323, %v1323
        %v1592 = vmul.f32 %v1327, %v1327
        %v1593 = vmul.f32 %v1329, %v1329
        %v1594 = vmul.f32 %v1331, %v1331
        %v1595 = vmul.f32 %v1333, %v1333
        %v1596 = vmul.f32 %v1337, %v1337
        %v1597 = vmul.f32 %v1339, %v1339
        %v1598 = vmul.f32 %v1341, %v1341
        %v1599 = vmul.f32 %v1343, %v1343
        %v1600 = vmul.f32 %v1347, %v1347
        %v1601 = vmul.f32 %v1349, %v1349
        %v1602 = vmul.f32 %v1351, %v1351
        %v1603 = vmul.f32 %v1353, %v1353
        %v1604 = vmul.f32 %v1357, %v1357
        %v1605 = vmul.f32 %v1359, %v1359
        %v1606 = vmul.f32 %v1361, %v1361
        %v1607 = vmul.f32 %v1363, %v1363
        %v1608 = vmul.f32 %v1367, %v1367
        %v1609 = vmul.f32 %v1369, %v1369
        %v1610 = vmul.f32 %v1371, %v1371
        %v1611 = vmul.f32 %v1373, %v1373
        %v1612 = vmul.f32 %v1377, %v1377
        %v1613 = vmul.f32 %v1379, %v1379
        %v1614 = vmul.f32 %v1381, %v1381
        %v1615 = vmul.f32 %v1383, %v1383
        %v1616 = vadd.f32 %v1540, %v1541
        %1617 = vadd.xlane.f32.xlu0 %v1616
        %v1618 = vpop.xlane.xlu0 %1617
        %v1619 = vadd.f32 %v1542, %v1543
        %1620 = vadd.xlane.f32.xlu0 %v1619
        %v1621 = vpop.xlane.xlu0 %1620
        %v1622 = vadd.f32 %v1544, %v1545
        %1623 = vadd.xlane.f32.xlu0 %v1622
        %v1624 = vpop.xlane.xlu0 %1623
        %v1625 = vadd.f32 %v1546, %v1547
        %1626 = vadd.xlane.f32.xlu0 %v1625
        %v1627 = vpop.xlane.xlu0 %1626
        %v1628 = vadd.f32 %v1548, %v1549
        %1629 = vadd.xlane.f32.xlu0 %v1628
        %v1630 = vpop.xlane.xlu0 %1629
        %v1631 = vadd.f32 %v1550, %v1551
        %1632 = vadd.xlane.f32.xlu0 %v1631
        %v1633 = vpop.xlane.xlu0 %1632
        %v1634 = vadd.f32 %v1552, %v1553
        %1635 = vadd.xlane.f32.xlu0 %v1634
        %v1636 = vpop.xlane.xlu0 %1635
        %v1637 = vadd.f32 %v1554, %v1555
        %1638 = vadd.xlane.f32.xlu0 %v1637
        %v1639 = vpop.xlane.xlu0 %1638
        %v1640 = vadd.f32 %v1556, %v1557
        %1641 = vadd.xlane.f32.xlu0 %v1640
        %v1642 = vpop.xlane.xlu0 %1641
        %v1643 = vadd.f32 %v1558, %v1559
        %1644 = vadd.xlane.f32.xlu0 %v1643
        %v1645 = vpop.xlane.xlu0 %1644
        %v1646 = vadd.f32 %v1560, %v1561
        %1647 = vadd.xlane.f32.xlu0 %v1646
        %v1648 = vpop.xlane.xlu0 %1647
        %v1649 = vadd.f32 %v1562, %v1563
        %1650 = vadd.xlane.f32.xlu0 %v1649
        %v1651 = vpop.xlane.xlu0 %1650
        %v1652 = vadd.f32 %v1564, %v1565
        %1653 = vadd.xlane.f32.xlu0 %v1652
        %v1654 = vpop.xlane.xlu0 %1653
        %v1655 = vadd.f32 %v1566, %v1567
        %1656 = vadd.xlane.f32.xlu0 %v1655
        %v1657 = vpop.xlane.xlu0 %1656
        %v1658 = vadd.f32 %v1568, %v1569
        %1659 = vadd.xlane.f32.xlu0 %v1658
        %v1660 = vpop.xlane.xlu0 %1659
        %v1661 = vadd.f32 %v1570, %v1571
        %1662 = vadd.xlane.f32.xlu0 %v1661
        %v1663 = vpop.xlane.xlu0 %1662
        %v1664 = vadd.f32 %v1572, %v1573
        %1665 = vadd.xlane.f32.xlu0 %v1664
        %v1666 = vpop.xlane.xlu0 %1665
        %v1667 = vadd.f32 %v1574, %v1575
        %1668 = vadd.xlane.f32.xlu0 %v1667
        %v1669 = vpop.xlane.xlu0 %1668
        %v1670 = vadd.f32 %v1576, %v1577
        %1671 = vadd.xlane.f32.xlu0 %v1670
        %v1672 = vpop.xlane.xlu0 %1671
        %v1673 = vadd.f32 %v1578, %v1579
        %1674 = vadd.xlane.f32.xlu0 %v1673
        %v1675 = vpop.xlane.xlu0 %1674
        %v1676 = vadd.f32 %v1580, %v1581
        %1677 = vadd.xlane.f32.xlu0 %v1676
        %v1678 = vpop.xlane.xlu0 %1677
        %v1679 = vadd.f32 %v1582, %v1583
        %1680 = vadd.xlane.f32.xlu0 %v1679
        %v1681 = vpop.xlane.xlu0 %1680
        %v1682 = vadd.f32 %v1584, %v1585
        %1683 = vadd.xlane.f32.xlu0 %v1682
        %v1684 = vpop.xlane.xlu0 %1683
        %v1685 = vadd.f32 %v1586, %v1587
        %1686 = vadd.xlane.f32.xlu0 %v1685
        %v1687 = vpop.xlane.xlu0 %1686
        %v1688 = vadd.f32 %v1588, %v1589
        %1689 = vadd.xlane.f32.xlu0 %v1688
        %v1690 = vpop.xlane.xlu0 %1689
        %v1691 = vadd.f32 %v1590, %v1591
        %1692 = vadd.xlane.f32.xlu0 %v1691
        %v1693 = vpop.xlane.xlu0 %1692
        %v1694 = vadd.f32 %v1592, %v1593
        %1695 = vadd.xlane.f32.xlu0 %v1694
        %v1696 = vpop.xlane.xlu0 %1695
        %v1697 = vadd.f32 %v1594, %v1595
        %1698 = vadd.xlane.f32.xlu0 %v1697
        %v1699 = vpop.xlane.xlu0 %1698
        %v1700 = vadd.f32 %v1596, %v1597
        %1701 = vadd.xlane.f32.xlu0 %v1700
        %v1702 = vpop.xlane.xlu0 %1701
        %v1703 = vadd.f32 %v1598, %v1599
        %1704 = vadd.xlane.f32.xlu0 %v1703
        %v1705 = vpop.xlane.xlu0 %1704
        %v1706 = vadd.f32 %v1600, %v1601
        %1707 = vadd.xlane.f32.xlu0 %v1706
        %v1708 = vpop.xlane.xlu0 %1707
        %v1709 = vadd.f32 %v1602, %v1603
        %1710 = vadd.xlane.f32.xlu0 %v1709
        %v1711 = vpop.xlane.xlu0 %1710
        %v1712 = vadd.f32 %v1604, %v1605
        %1713 = vadd.xlane.f32.xlu0 %v1712
        %v1714 = vpop.xlane.xlu0 %1713
        %v1715 = vadd.f32 %v1606, %v1607
        %1716 = vadd.xlane.f32.xlu0 %v1715
        %v1717 = vpop.xlane.xlu0 %1716
        %v1718 = vadd.f32 %v1608, %v1609
        %1719 = vadd.xlane.f32.xlu0 %v1718
        %v1720 = vpop.xlane.xlu0 %1719
        %v1721 = vadd.f32 %v1610, %v1611
        %1722 = vadd.xlane.f32.xlu0 %v1721
        %v1723 = vpop.xlane.xlu0 %1722
        %v1724 = vadd.f32 %v1612, %v1613
        %1725 = vadd.xlane.f32.xlu0 %v1724
        %v1726 = vpop.xlane.xlu0 %1725
        %v1727 = vadd.f32 %v1614, %v1615
        %1728 = vadd.xlane.f32.xlu0 %v1727
        %v1729 = vpop.xlane.xlu0 %1728
        %v1730 = vmul.f32 %v1618, %v1501
        %v1731 = vmul.f32 %v1621, %v1501
        %v1732 = vmul.f32 %v1624, %v1501
        %v1733 = vmul.f32 %v1627, %v1501
        %v1734 = vmul.f32 %v1630, %v1501
        %v1735 = vmul.f32 %v1633, %v1501
        %v1736 = vmul.f32 %v1636, %v1501
        %v1737 = vmul.f32 %v1639, %v1501
        %v1738 = vmul.f32 %v1642, %v1501
        %v1739 = vmul.f32 %v1645, %v1501
        %v1740 = vmul.f32 %v1648, %v1501
        %v1741 = vmul.f32 %v1651, %v1501
        %v1742 = vmul.f32 %v1654, %v1501
        %v1743 = vmul.f32 %v1657, %v1501
        %v1744 = vmul.f32 %v1660, %v1501
        %v1745 = vmul.f32 %v1663, %v1501
        %v1746 = vmul.f32 %v1666, %v1501
        %v1747 = vmul.f32 %v1669, %v1501
        %v1748 = vmul.f32 %v1672, %v1501
        %v1749 = vmul.f32 %v1675, %v1501
        %v1750 = vmul.f32 %v1678, %v1501
        %v1751 = vmul.f32 %v1681, %v1501
        %v1752 = vmul.f32 %v1684, %v1501
        %v1753 = vmul.f32 %v1687, %v1501
        %v1754 = vmul.f32 %v1690, %v1501
        %v1755 = vmul.f32 %v1693, %v1501
        %v1756 = vmul.f32 %v1696, %v1501
        %v1757 = vmul.f32 %v1699, %v1501
        %v1758 = vmul.f32 %v1702, %v1501
        %v1759 = vmul.f32 %v1705, %v1501
        %v1760 = vmul.f32 %v1708, %v1501
        %v1761 = vmul.f32 %v1711, %v1501
        %v1762 = vmul.f32 %v1714, %v1501
        %v1763 = vmul.f32 %v1717, %v1501
        %v1764 = vmul.f32 %v1720, %v1501
        %v1765 = vmul.f32 %v1723, %v1501
        %v1766 = vmul.f32 %v1726, %v1501
        %v1767 = vmul.f32 %v1729, %v1501
        %v1768 = vmul.f32 %v1502, %v1502
        %v1769 = vmul.f32 %v1503, %v1503
        %v1770 = vmul.f32 %v1504, %v1504
        %v1771 = vmul.f32 %v1505, %v1505
        %v1772 = vmul.f32 %v1506, %v1506
        %v1773 = vmul.f32 %v1507, %v1507
        %v1774 = vmul.f32 %v1508, %v1508
        %v1775 = vmul.f32 %v1509, %v1509
        %v1776 = vmul.f32 %v1510, %v1510
        %v1777 = vmul.f32 %v1511, %v1511
        %v1778 = vmul.f32 %v1512, %v1512
        %v1779 = vmul.f32 %v1513, %v1513
        %v1780 = vmul.f32 %v1514, %v1514
        %v1781 = vmul.f32 %v1515, %v1515
        %v1782 = vmul.f32 %v1516, %v1516
        %v1783 = vmul.f32 %v1517, %v1517
        %v1784 = vmul.f32 %v1518, %v1518
        %v1785 = vmul.f32 %v1519, %v1519
        %v1786 = vmul.f32 %v1520, %v1520
        %v1787 = vmul.f32 %v1521, %v1521
        %v1788 = vmul.f32 %v1522, %v1522
        %v1789 = vmul.f32 %v1523, %v1523
        %v1790 = vmul.f32 %v1524, %v1524
        %v1791 = vmul.f32 %v1525, %v1525
        %v1792 = vmul.f32 %v1526, %v1526
        %v1793 = vmul.f32 %v1527, %v1527
        %v1794 = vmul.f32 %v1528, %v1528
        %v1795 = vmul.f32 %v1529, %v1529
        %v1796 = vmul.f32 %v1530, %v1530
        %v1797 = vmul.f32 %v1531, %v1531
        %v1798 = vmul.f32 %v1532, %v1532
        %v1799 = vmul.f32 %v1533, %v1533
        %v1800 = vmul.f32 %v1534, %v1534
        %v1801 = vmul.f32 %v1535, %v1535
        %v1802 = vmul.f32 %v1536, %v1536
        %v1803 = vmul.f32 %v1537, %v1537
        %v1804 = vmul.f32 %v1538, %v1538
        %v1805 = vmul.f32 %v1539, %v1539
        %v1806 = vsub.f32 %v1730, %v1768
        %v1807 = vsub.f32 %v1731, %v1769
        %v1808 = vsub.f32 %v1732, %v1770
        %v1809 = vsub.f32 %v1733, %v1771
        %v1810 = vsub.f32 %v1734, %v1772
        %v1811 = vsub.f32 %v1735, %v1773
        %v1812 = vsub.f32 %v1736, %v1774
        %v1813 = vsub.f32 %v1737, %v1775
        %v1814 = vsub.f32 %v1738, %v1776
        %v1815 = vsub.f32 %v1739, %v1777
        %v1816 = vsub.f32 %v1740, %v1778
        %v1817 = vsub.f32 %v1741, %v1779
        %v1818 = vsub.f32 %v1742, %v1780
        %v1819 = vsub.f32 %v1743, %v1781
        %v1820 = vsub.f32 %v1744, %v1782
        %v1821 = vsub.f32 %v1745, %v1783
        %v1822 = vsub.f32 %v1746, %v1784
        %v1823 = vsub.f32 %v1747, %v1785
        %v1824 = vsub.f32 %v1748, %v1786
        %v1825 = vsub.f32 %v1749, %v1787
        %v1826 = vsub.f32 %v1750, %v1788
        %v1827 = vsub.f32 %v1751, %v1789
        %v1828 = vsub.f32 %v1752, %v1790
        %v1829 = vsub.f32 %v1753, %v1791
        %v1830 = vsub.f32 %v1754, %v1792
        %v1831 = vsub.f32 %v1755, %v1793
        %v1832 = vsub.f32 %v1756, %v1794
        %v1833 = vsub.f32 %v1757, %v1795
        %v1834 = vsub.f32 %v1758, %v1796
        %v1835 = vsub.f32 %v1759, %v1797
        %v1836 = vsub.f32 %v1760, %v1798
        %v1837 = vsub.f32 %v1761, %v1799
        %v1838 = vsub.f32 %v1762, %v1800
        %v1839 = vsub.f32 %v1763, %v1801
        %v1840 = vsub.f32 %v1764, %v1802
        %v1841 = vsub.f32 %v1765, %v1803
        %v1842 = vsub.f32 %v1766, %v1804
        %v1843 = vsub.f32 %v1767, %v1805
        %v1844 = vsub.f32 %v1197, %v1502
        %v1845 = vsub.f32 %v1199, %v1502
        %v1846 = vsub.f32 %v1201, %v1503
        %v1847 = vsub.f32 %v1203, %v1503
        %v1848 = vsub.f32 %v1207, %v1504
        %v1849 = vsub.f32 %v1209, %v1504
        %v1850 = vsub.f32 %v1211, %v1505
        %v1851 = vsub.f32 %v1213, %v1505
        %v1852 = vsub.f32 %v1217, %v1506
        %v1853 = vsub.f32 %v1219, %v1506
        %v1854 = vsub.f32 %v1221, %v1507
        %v1855 = vsub.f32 %v1223, %v1507
        %v1856 = vsub.f32 %v1227, %v1508
        %v1857 = vsub.f32 %v1229, %v1508
        %v1858 = vsub.f32 %v1231, %v1509
        %v1859 = vsub.f32 %v1233, %v1509
        %v1860 = vsub.f32 %v1237, %v1510
        %v1861 = vsub.f32 %v1239, %v1510
        %v1862 = vsub.f32 %v1241, %v1511
        %v1863 = vsub.f32 %v1243, %v1511
        %v1864 = vsub.f32 %v1247, %v1512
        %v1865 = vsub.f32 %v1249, %v1512
        %v1866 = vsub.f32 %v1251, %v1513
        %v1867 = vsub.f32 %v1253, %v1513
        %v1868 = vsub.f32 %v1257, %v1514
        %v1869 = vsub.f32 %v1259, %v1514
        %v1870 = vsub.f32 %v1261, %v1515
        %v1871 = vsub.f32 %v1263, %v1515
        %v1872 = vsub.f32 %v1267, %v1516
        %v1873 = vsub.f32 %v1269, %v1516
        %v1874 = vsub.f32 %v1271, %v1517
        %v1875 = vsub.f32 %v1273, %v1517
        %v1876 = vsub.f32 %v1277, %v1518
        %v1877 = vsub.f32 %v1279, %v1518
        %v1878 = vsub.f32 %v1281, %v1519
        %v1879 = vsub.f32 %v1283, %v1519
        %v1880 = vsub.f32 %v1287, %v1520
        %v1881 = vsub.f32 %v1289, %v1520
        %v1882 = vsub.f32 %v1291, %v1521
        %v1883 = vsub.f32 %v1293, %v1521
        %v1884 = vsub.f32 %v1297, %v1522
        %v1885 = vsub.f32 %v1299, %v1522
        %v1886 = vsub.f32 %v1301, %v1523
        %v1887 = vsub.f32 %v1303, %v1523
        %v1888 = vsub.f32 %v1307, %v1524
        %v1889 = vsub.f32 %v1309, %v1524
        %v1890 = vsub.f32 %v1311, %v1525
        %v1891 = vsub.f32 %v1313, %v1525
        %v1892 = vsub.f32 %v1317, %v1526
        %v1893 = vsub.f32 %v1319, %v1526
        %v1894 = vsub.f32 %v1321, %v1527
        %v1895 = vsub.f32 %v1323, %v1527
        %v1896 = vsub.f32 %v1327, %v1528
        %v1897 = vsub.f32 %v1329, %v1528
        %v1898 = vsub.f32 %v1331, %v1529
        %v1899 = vsub.f32 %v1333, %v1529
        %v1900 = vsub.f32 %v1337, %v1530
        %v1901 = vsub.f32 %v1339, %v1530
        %v1902 = vsub.f32 %v1341, %v1531
        %v1903 = vsub.f32 %v1343, %v1531
        %v1904 = vsub.f32 %v1347, %v1532
        %v1905 = vsub.f32 %v1349, %v1532
        %v1906 = vsub.f32 %v1351, %v1533
        %v1907 = vsub.f32 %v1353, %v1533
        %v1908 = vsub.f32 %v1357, %v1534
        %v1909 = vsub.f32 %v1359, %v1534
        %v1910 = vsub.f32 %v1361, %v1535
        %v1911 = vsub.f32 %v1363, %v1535
        %v1912 = vsub.f32 %v1367, %v1536
        %v1913 = vsub.f32 %v1369, %v1536
        %v1914 = vsub.f32 %v1371, %v1537
        %v1915 = vsub.f32 %v1373, %v1537
        %v1916 = vsub.f32 %v1377, %v1538
        %v1917 = vsub.f32 %v1379, %v1538
        %v1918 = vsub.f32 %v1381, %v1539
        %v1919 = vsub.f32 %v1383, %v1539
        %v1920 = vadd.f32 %v1806, 1e-05
        %v1921 = vadd.f32 %v1807, 1e-05
        %v1922 = vadd.f32 %v1808, 1e-05
        %v1923 = vadd.f32 %v1809, 1e-05
        %v1924 = vadd.f32 %v1810, 1e-05
        %v1925 = vadd.f32 %v1811, 1e-05
        %v1926 = vadd.f32 %v1812, 1e-05
        %v1927 = vadd.f32 %v1813, 1e-05
        %v1928 = vadd.f32 %v1814, 1e-05
        %v1929 = vadd.f32 %v1815, 1e-05
        %v1930 = vadd.f32 %v1816, 1e-05
        %v1931 = vadd.f32 %v1817, 1e-05
        %v1932 = vadd.f32 %v1818, 1e-05
        %v1933 = vadd.f32 %v1819, 1e-05
        %v1934 = vadd.f32 %v1820, 1e-05
        %v1935 = vadd.f32 %v1821, 1e-05
        %v1936 = vadd.f32 %v1822, 1e-05
        %v1937 = vadd.f32 %v1823, 1e-05
        %v1938 = vadd.f32 %v1824, 1e-05
        %v1939 = vadd.f32 %v1825, 1e-05
        %v1940 = vadd.f32 %v1826, 1e-05
        %v1941 = vadd.f32 %v1827, 1e-05
        %v1942 = vadd.f32 %v1828, 1e-05
        %v1943 = vadd.f32 %v1829, 1e-05
        %v1944 = vadd.f32 %v1830, 1e-05
        %v1945 = vadd.f32 %v1831, 1e-05
        %v1946 = vadd.f32 %v1832, 1e-05
        %v1947 = vadd.f32 %v1833, 1e-05
        %v1948 = vadd.f32 %v1834, 1e-05
        %v1949 = vadd.f32 %v1835, 1e-05
        %v1950 = vadd.f32 %v1836, 1e-05
        %v1951 = vadd.f32 %v1837, 1e-05
        %v1952 = vadd.f32 %v1838, 1e-05
        %v1953 = vadd.f32 %v1839, 1e-05
        %v1954 = vadd.f32 %v1840, 1e-05
        %v1955 = vadd.f32 %v1841, 1e-05
        %v1956 = vadd.f32 %v1842, 1e-05
        %v1957 = vadd.f32 %v1843, 1e-05
        %v1958 = vrsqrt.pop %v1920
        %v1959 = vrsqrt.pop %v1921
        %v1960 = vrsqrt.pop %v1922
        %v1961 = vrsqrt.pop %v1923
        %v1962 = vrsqrt.pop %v1924
        %v1963 = vrsqrt.pop %v1925
        %v1964 = vrsqrt.pop %v1926
        %v1965 = vrsqrt.pop %v1927
        %v1966 = vrsqrt.pop %v1928
        %v1967 = vrsqrt.pop %v1929
        %v1968 = vrsqrt.pop %v1930
        %v1969 = vrsqrt.pop %v1931
        %v1970 = vrsqrt.pop %v1932
        %v1971 = vrsqrt.pop %v1933
        %v1972 = vrsqrt.pop %v1934
        %v1973 = vrsqrt.pop %v1935
        %v1974 = vrsqrt.pop %v1936
        %v1975 = vrsqrt.pop %v1937
        %v1976 = vrsqrt.pop %v1938
        %v1977 = vrsqrt.pop %v1939
        %v1978 = vrsqrt.pop %v1940
        %v1979 = vrsqrt.pop %v1941
        %v1980 = vrsqrt.pop %v1942
        %v1981 = vrsqrt.pop %v1943
        %v1982 = vrsqrt.pop %v1944
        %v1983 = vrsqrt.pop %v1945
        %v1984 = vrsqrt.pop %v1946
        %v1985 = vrsqrt.pop %v1947
        %v1986 = vrsqrt.pop %v1948
        %v1987 = vrsqrt.pop %v1949
        %v1988 = vrsqrt.pop %v1950
        %v1989 = vrsqrt.pop %v1951
        %v1990 = vrsqrt.pop %v1952
        %v1991 = vrsqrt.pop %v1953
        %v1992 = vrsqrt.pop %v1954
        %v1993 = vrsqrt.pop %v1955
        %v1994 = vrsqrt.pop %v1956
        %v1995 = vrsqrt.pop %v1957
        %v1996 = vmul.f32 %v1844, %v1958
        %v1997 = vmul.f32 %v1845, %v1958
        %v1998 = vmul.f32 %v1846, %v1959
        %v1999 = vmul.f32 %v1847, %v1959
        %v2000 = vmul.f32 %v1848, %v1960
        %v2001 = vmul.f32 %v1849, %v1960
        %v2002 = vmul.f32 %v1850, %v1961
        %v2003 = vmul.f32 %v1851, %v1961
        %v2004 = vmul.f32 %v1852, %v1962
        %v2005 = vmul.f32 %v1853, %v1962
        %v2006 = vmul.f32 %v1854, %v1963
        %v2007 = vmul.f32 %v1855, %v1963
        %v2008 = vmul.f32 %v1856, %v1964
        %v2009 = vmul.f32 %v1857, %v1964
        %v2010 = vmul.f32 %v1858, %v1965
        %v2011 = vmul.f32 %v1859, %v1965
        %v2012 = vmul.f32 %v1860, %v1966
        %v2013 = vmul.f32 %v1861, %v1966
        %v2014 = vmul.f32 %v1862, %v1967
        %v2015 = vmul.f32 %v1863, %v1967
        %v2016 = vmul.f32 %v1864, %v1968
        %v2017 = vmul.f32 %v1865, %v1968
        %v2018 = vmul.f32 %v1866, %v1969
        %v2019 = vmul.f32 %v1867, %v1969
        %v2020 = vmul.f32 %v1868, %v1970
        %v2021 = vmul.f32 %v1869, %v1970
        %v2022 = vmul.f32 %v1870, %v1971
        %v2023 = vmul.f32 %v1871, %v1971
        %v2024 = vmul.f32 %v1872, %v1972
        %v2025 = vmul.f32 %v1873, %v1972
        %v2026 = vmul.f32 %v1874, %v1973
        %v2027 = vmul.f32 %v1875, %v1973
        %v2028 = vmul.f32 %v1876, %v1974
        %v2029 = vmul.f32 %v1877, %v1974
        %v2030 = vmul.f32 %v1878, %v1975
        %v2031 = vmul.f32 %v1879, %v1975
        %v2032 = vmul.f32 %v1880, %v1976
        %v2033 = vmul.f32 %v1881, %v1976
        %v2034 = vmul.f32 %v1882, %v1977
        %v2035 = vmul.f32 %v1883, %v1977
        %v2036 = vmul.f32 %v1884, %v1978
        %v2037 = vmul.f32 %v1885, %v1978
        %v2038 = vmul.f32 %v1886, %v1979
        %v2039 = vmul.f32 %v1887, %v1979
        %v2040 = vmul.f32 %v1888, %v1980
        %v2041 = vmul.f32 %v1889, %v1980
        %v2042 = vmul.f32 %v1890, %v1981
        %v2043 = vmul.f32 %v1891, %v1981
        %v2044 = vmul.f32 %v1892, %v1982
        %v2045 = vmul.f32 %v1893, %v1982
        %v2046 = vmul.f32 %v1894, %v1983
        %v2047 = vmul.f32 %v1895, %v1983
        %v2048 = vmul.f32 %v1896, %v1984
        %v2049 = vmul.f32 %v1897, %v1984
        %v2050 = vmul.f32 %v1898, %v1985
        %v2051 = vmul.f32 %v1899, %v1985
        %v2052 = vmul.f32 %v1900, %v1986
        %v2053 = vmul.f32 %v1901, %v1986
        %v2054 = vmul.f32 %v1902, %v1987
        %v2055 = vmul.f32 %v1903, %v1987
        %v2056 = vmul.f32 %v1904, %v1988
        %v2057 = vmul.f32 %v1905, %v1988
        %v2058 = vmul.f32 %v1906, %v1989
        %v2059 = vmul.f32 %v1907, %v1989
        %v2060 = vmul.f32 %v1908, %v1990
        %v2061 = vmul.f32 %v1909, %v1990
        %v2062 = vmul.f32 %v1910, %v1991
        %v2063 = vmul.f32 %v1911, %v1991
        %v2064 = vmul.f32 %v1912, %v1992
        %v2065 = vmul.f32 %v1913, %v1992
        %v2066 = vmul.f32 %v1914, %v1993
        %v2067 = vmul.f32 %v1915, %v1993
        %v2068 = vmul.f32 %v1916, %v1994
        %v2069 = vmul.f32 %v1917, %v1994
        %v2070 = vmul.f32 %v1918, %v1995
        %v2071 = vmul.f32 %v1919, %v1995
        %v2073 = vlaneseq
        %v2074 = vshrl.u32 %v2073, 7
        %v2075 = vsub.s32 0, %v2074
        %v2076 = vrot.slane %v1385, %v2075
        %v2077 = vlaneseq
        %v2078 = vshrl.u32 %v2077, 7
        %v2079 = vsub.s32 1, %v2078
        %v2080 = vrot.slane %v1385, %v2079
        %v2083 = vmul.f32 %v1996, %v2076
        %v2084 = vmul.f32 %v1997, %v2080
        %v2085 = vmul.f32 %v1998, %v2076
        %v2086 = vmul.f32 %v1999, %v2080
        %v2087 = vmul.f32 %v2000, %v2076
        %v2088 = vmul.f32 %v2001, %v2080
        %v2089 = vmul.f32 %v2002, %v2076
        %v2090 = vmul.f32 %v2003, %v2080
        %v2091 = vmul.f32 %v2004, %v2076
        %v2092 = vmul.f32 %v2005, %v2080
        %v2093 = vmul.f32 %v2006, %v2076
        %v2094 = vmul.f32 %v2007, %v2080
        %v2095 = vmul.f32 %v2008, %v2076
        %v2096 = vmul.f32 %v2009, %v2080
        %v2097 = vmul.f32 %v2010, %v2076
        %v2098 = vmul.f32 %v2011, %v2080
        %v2099 = vmul.f32 %v2012, %v2076
        %v2100 = vmul.f32 %v2013, %v2080
        %v2101 = vmul.f32 %v2014, %v2076
        %v2102 = vmul.f32 %v2015, %v2080
        %v2103 = vmul.f32 %v2016, %v2076
        %v2104 = vmul.f32 %v2017, %v2080
        %v2105 = vmul.f32 %v2018, %v2076
        %v2106 = vmul.f32 %v2019, %v2080
        %v2107 = vmul.f32 %v2020, %v2076
        %v2108 = vmul.f32 %v2021, %v2080
        %v2109 = vmul.f32 %v2022, %v2076
        %v2110 = vmul.f32 %v2023, %v2080
        %v2111 = vmul.f32 %v2024, %v2076
        %v2112 = vmul.f32 %v2025, %v2080
        %v2113 = vmul.f32 %v2026, %v2076
        %v2114 = vmul.f32 %v2027, %v2080
        %v2115 = vmul.f32 %v2028, %v2076
        %v2116 = vmul.f32 %v2029, %v2080
        %v2117 = vmul.f32 %v2030, %v2076
        %v2118 = vmul.f32 %v2031, %v2080
        %v2119 = vmul.f32 %v2032, %v2076
        %v2120 = vmul.f32 %v2033, %v2080
        %v2121 = vmul.f32 %v2034, %v2076
        %v2122 = vmul.f32 %v2035, %v2080
        %v2123 = vmul.f32 %v2036, %v2076
        %v2124 = vmul.f32 %v2037, %v2080
        %v2125 = vmul.f32 %v2038, %v2076
        %v2126 = vmul.f32 %v2039, %v2080
        %v2127 = vmul.f32 %v2040, %v2076
        %v2128 = vmul.f32 %v2041, %v2080
        %v2129 = vmul.f32 %v2042, %v2076
        %v2130 = vmul.f32 %v2043, %v2080
        %v2131 = vmul.f32 %v2044, %v2076
        %v2132 = vmul.f32 %v2045, %v2080
        %v2133 = vmul.f32 %v2046, %v2076
        %v2134 = vmul.f32 %v2047, %v2080
        %v2135 = vmul.f32 %v2048, %v2076
        %v2136 = vmul.f32 %v2049, %v2080
        %v2137 = vmul.f32 %v2050, %v2076
        %v2138 = vmul.f32 %v2051, %v2080
        %v2139 = vmul.f32 %v2052, %v2076
        %v2140 = vmul.f32 %v2053, %v2080
        %v2141 = vmul.f32 %v2054, %v2076
        %v2142 = vmul.f32 %v2055, %v2080
        %v2143 = vmul.f32 %v2056, %v2076
        %v2144 = vmul.f32 %v2057, %v2080
        %v2145 = vmul.f32 %v2058, %v2076
        %v2146 = vmul.f32 %v2059, %v2080
        %v2147 = vmul.f32 %v2060, %v2076
        %v2148 = vmul.f32 %v2061, %v2080
        %v2149 = vmul.f32 %v2062, %v2076
        %v2150 = vmul.f32 %v2063, %v2080
        %v2151 = vmul.f32 %v2064, %v2076
        %v2152 = vmul.f32 %v2065, %v2080
        %v2153 = vmul.f32 %v2066, %v2076
        %v2154 = vmul.f32 %v2067, %v2080
        %v2155 = vmul.f32 %v2068, %v2076
        %v2156 = vmul.f32 %v2069, %v2080
        %v2157 = vmul.f32 %v2070, %v2076
        %v2158 = vmul.f32 %v2071, %v2080
        %v2160 = vlaneseq
        %v2161 = vshrl.u32 %v2160, 7
        %v2162 = vsub.s32 0, %v2161
        %v2163 = vrot.slane %v1386, %v2162
        %v2164 = vlaneseq
        %v2165 = vshrl.u32 %v2164, 7
        %v2166 = vsub.s32 1, %v2165
        %v2167 = vrot.slane %v1386, %v2166
        %v2170 = vadd.f32 %v2083, %v2163
        %v2171 = vadd.f32 %v2084, %v2167
        %v2172 = vadd.f32 %v2085, %v2163
        %v2173 = vadd.f32 %v2086, %v2167
        %v2174 = vadd.f32 %v2087, %v2163
        %v2175 = vadd.f32 %v2088, %v2167
        %v2176 = vadd.f32 %v2089, %v2163
        %v2177 = vadd.f32 %v2090, %v2167
        %v2178 = vadd.f32 %v2091, %v2163
        %v2179 = vadd.f32 %v2092, %v2167
        %v2180 = vadd.f32 %v2093, %v2163
        %v2181 = vadd.f32 %v2094, %v2167
        %v2182 = vadd.f32 %v2095, %v2163
        %v2183 = vadd.f32 %v2096, %v2167
        %v2184 = vadd.f32 %v2097, %v2163
        %v2185 = vadd.f32 %v2098, %v2167
        %v2186 = vadd.f32 %v2099, %v2163
        %v2187 = vadd.f32 %v2100, %v2167
        %v2188 = vadd.f32 %v2101, %v2163
        %v2189 = vadd.f32 %v2102, %v2167
        %v2190 = vadd.f32 %v2103, %v2163
        %v2191 = vadd.f32 %v2104, %v2167
        %v2192 = vadd.f32 %v2105, %v2163
        %v2193 = vadd.f32 %v2106, %v2167
        %v2194 = vadd.f32 %v2107, %v2163
        %v2195 = vadd.f32 %v2108, %v2167
        %v2196 = vadd.f32 %v2109, %v2163
        %v2197 = vadd.f32 %v2110, %v2167
        %v2198 = vadd.f32 %v2111, %v2163
        %v2199 = vadd.f32 %v2112, %v2167
        %v2200 = vadd.f32 %v2113, %v2163
        %v2201 = vadd.f32 %v2114, %v2167
        %v2202 = vadd.f32 %v2115, %v2163
        %v2203 = vadd.f32 %v2116, %v2167
        %v2204 = vadd.f32 %v2117, %v2163
        %v2205 = vadd.f32 %v2118, %v2167
        %v2206 = vadd.f32 %v2119, %v2163
        %v2207 = vadd.f32 %v2120, %v2167
        %v2208 = vadd.f32 %v2121, %v2163
        %v2209 = vadd.f32 %v2122, %v2167
        %v2210 = vadd.f32 %v2123, %v2163
        %v2211 = vadd.f32 %v2124, %v2167
        %v2212 = vadd.f32 %v2125, %v2163
        %v2213 = vadd.f32 %v2126, %v2167
        %v2214 = vadd.f32 %v2127, %v2163
        %v2215 = vadd.f32 %v2128, %v2167
        %v2216 = vadd.f32 %v2129, %v2163
        %v2217 = vadd.f32 %v2130, %v2167
        %v2218 = vadd.f32 %v2131, %v2163
        %v2219 = vadd.f32 %v2132, %v2167
        %v2220 = vadd.f32 %v2133, %v2163
        %v2221 = vadd.f32 %v2134, %v2167
        %v2222 = vadd.f32 %v2135, %v2163
        %v2223 = vadd.f32 %v2136, %v2167
        %v2224 = vadd.f32 %v2137, %v2163
        %v2225 = vadd.f32 %v2138, %v2167
        %v2226 = vadd.f32 %v2139, %v2163
        %v2227 = vadd.f32 %v2140, %v2167
        %v2228 = vadd.f32 %v2141, %v2163
        %v2229 = vadd.f32 %v2142, %v2167
        %v2230 = vadd.f32 %v2143, %v2163
        %v2231 = vadd.f32 %v2144, %v2167
        %v2232 = vadd.f32 %v2145, %v2163
        %v2233 = vadd.f32 %v2146, %v2167
        %v2234 = vadd.f32 %v2147, %v2163
        %v2235 = vadd.f32 %v2148, %v2167
        %v2236 = vadd.f32 %v2149, %v2163
        %v2237 = vadd.f32 %v2150, %v2167
        %v2238 = vadd.f32 %v2151, %v2163
        %v2239 = vadd.f32 %v2152, %v2167
        %v2240 = vadd.f32 %v2153, %v2163
        %v2241 = vadd.f32 %v2154, %v2167
        %v2242 = vadd.f32 %v2155, %v2163
        %v2243 = vadd.f32 %v2156, %v2167
        %v2244 = vadd.f32 %v2157, %v2163
        %v2245 = vadd.f32 %v2158, %v2167
        %v2246 = vmax.f32 %v2170, 0.0
        %v2247 = vmax.f32 %v2171, 0.0
        %v2248 = vmax.f32 %v2172, 0.0
        %v2249 = vmax.f32 %v2173, 0.0
        %v2250 = vmax.f32 %v2174, 0.0
        %v2251 = vmax.f32 %v2175, 0.0
        %v2252 = vmax.f32 %v2176, 0.0
        %v2253 = vmax.f32 %v2177, 0.0
        %v2254 = vmax.f32 %v2178, 0.0
        %v2255 = vmax.f32 %v2179, 0.0
        %v2256 = vmax.f32 %v2180, 0.0
        %v2257 = vmax.f32 %v2181, 0.0
        %v2258 = vmax.f32 %v2182, 0.0
        %v2259 = vmax.f32 %v2183, 0.0
        %v2260 = vmax.f32 %v2184, 0.0
        %v2261 = vmax.f32 %v2185, 0.0
        %v2262 = vmax.f32 %v2186, 0.0
        %v2263 = vmax.f32 %v2187, 0.0
        %v2264 = vmax.f32 %v2188, 0.0
        %v2265 = vmax.f32 %v2189, 0.0
        %v2266 = vmax.f32 %v2190, 0.0
        %v2267 = vmax.f32 %v2191, 0.0
        %v2268 = vmax.f32 %v2192, 0.0
        %v2269 = vmax.f32 %v2193, 0.0
        %v2270 = vmax.f32 %v2194, 0.0
        %v2271 = vmax.f32 %v2195, 0.0
        %v2272 = vmax.f32 %v2196, 0.0
        %v2273 = vmax.f32 %v2197, 0.0
        %v2274 = vmax.f32 %v2198, 0.0
        %v2275 = vmax.f32 %v2199, 0.0
        %v2276 = vmax.f32 %v2200, 0.0
        %v2277 = vmax.f32 %v2201, 0.0
        %v2278 = vmax.f32 %v2202, 0.0
        %v2279 = vmax.f32 %v2203, 0.0
        %v2280 = vmax.f32 %v2204, 0.0
        %v2281 = vmax.f32 %v2205, 0.0
        %v2282 = vmax.f32 %v2206, 0.0
        %v2283 = vmax.f32 %v2207, 0.0
        %v2284 = vmax.f32 %v2208, 0.0
        %v2285 = vmax.f32 %v2209, 0.0
        %v2286 = vmax.f32 %v2210, 0.0
        %v2287 = vmax.f32 %v2211, 0.0
        %v2288 = vmax.f32 %v2212, 0.0
        %v2289 = vmax.f32 %v2213, 0.0
        %v2290 = vmax.f32 %v2214, 0.0
        %v2291 = vmax.f32 %v2215, 0.0
        %v2292 = vmax.f32 %v2216, 0.0
        %v2293 = vmax.f32 %v2217, 0.0
        %v2294 = vmax.f32 %v2218, 0.0
        %v2295 = vmax.f32 %v2219, 0.0
        %v2296 = vmax.f32 %v2220, 0.0
        %v2297 = vmax.f32 %v2221, 0.0
        %v2298 = vmax.f32 %v2222, 0.0
        %v2299 = vmax.f32 %v2223, 0.0
        %v2300 = vmax.f32 %v2224, 0.0
        %v2301 = vmax.f32 %v2225, 0.0
        %v2302 = vmax.f32 %v2226, 0.0
        %v2303 = vmax.f32 %v2227, 0.0
        %v2304 = vmax.f32 %v2228, 0.0
        %v2305 = vmax.f32 %v2229, 0.0
        %v2306 = vmax.f32 %v2230, 0.0
        %v2307 = vmax.f32 %v2231, 0.0
        %v2308 = vmax.f32 %v2232, 0.0
        %v2309 = vmax.f32 %v2233, 0.0
        %v2310 = vmax.f32 %v2234, 0.0
        %v2311 = vmax.f32 %v2235, 0.0
        %v2312 = vmax.f32 %v2236, 0.0
        %v2313 = vmax.f32 %v2237, 0.0
        %v2314 = vmax.f32 %v2238, 0.0
        %v2315 = vmax.f32 %v2239, 0.0
        %v2316 = vmax.f32 %v2240, 0.0
        %v2317 = vmax.f32 %v2241, 0.0
        %v2318 = vmax.f32 %v2242, 0.0
        %v2319 = vmax.f32 %v2243, 0.0
        %v2320 = vmax.f32 %v2244, 0.0
        %v2321 = vmax.f32 %v2245, 0.0
        %2322 = vst [vmem:[%s302] sm:$0xff] %v2246
        %2323 = vst [vmem:[%s302 + $0x8] sm:$0xff] %v2247
        %2324 = vst [vmem:[%s302 + $0x10] sm:$0xff] %v2248
        %2325 = vst [vmem:[%s302 + $0x18] sm:$0xff] %v2249
        %2326 = vst [vmem:[%s302 + $0x20] sm:$0xff] %v2250
        %2327 = vst [vmem:[%s302 + $0x28] sm:$0xff] %v2251
        %2328 = vst [vmem:[%s302 + $0x30] sm:$0xff] %v2252
        %2329 = vst [vmem:[%s302 + $0x38] sm:$0xff] %v2253
        %2330 = vst [vmem:[%s302 + $0x40] sm:$0xff] %v2254
        %2331 = vst [vmem:[%s302 + $0x48] sm:$0xff] %v2255
        %2332 = vst [vmem:[%s302 + $0x50] sm:$0xff] %v2256
        %2333 = vst [vmem:[%s302 + $0x58] sm:$0xff] %v2257
        %2334 = vst [vmem:[%s302 + $0x60] sm:$0xff] %v2258
        %2335 = vst [vmem:[%s302 + $0x68] sm:$0xff] %v2259
        %2336 = vst [vmem:[%s302 + $0x70] sm:$0xff] %v2260
        %2337 = vst [vmem:[%s302 + $0x78] sm:$0xff] %v2261
        %2338 = vst [vmem:[%s302 + $0x80] sm:$0xff] %v2262
        %2339 = vst [vmem:[%s302 + $0x88] sm:$0xff] %v2263
        %2340 = vst [vmem:[%s302 + $0x90] sm:$0xff] %v2264
        %2341 = vst [vmem:[%s302 + $0x98] sm:$0xff] %v2265
        %2342 = vst [vmem:[%s302 + $0xa0] sm:$0xff] %v2266
        %2343 = vst [vmem:[%s302 + $0xa8] sm:$0xff] %v2267
        %2344 = vst [vmem:[%s302 + $0xb0] sm:$0xff] %v2268
        %2345 = vst [vmem:[%s302 + $0xb8] sm:$0xff] %v2269
        %2346 = vst [vmem:[%s302 + $0xc0] sm:$0xff] %v2270
        %2347 = vst [vmem:[%s302 + $0xc8] sm:$0xff] %v2271
        %2348 = vst [vmem:[%s302 + $0xd0] sm:$0xff] %v2272
        %2349 = vst [vmem:[%s302 + $0xd8] sm:$0xff] %v2273
        %2350 = vst [vmem:[%s302 + $0xe0] sm:$0xff] %v2274
        %2351 = vst [vmem:[%s302 + $0xe8] sm:$0xff] %v2275
        %2352 = vst [vmem:[%s302 + $0xf0] sm:$0xff] %v2276
        %2353 = vst [vmem:[%s302 + $0xf8] sm:$0xff] %v2277
        %2354 = vst [vmem:[%s302 + $0x100] sm:$0xff] %v2278
        %2355 = vst [vmem:[%s302 + $0x108] sm:$0xff] %v2279
        %2356 = vst [vmem:[%s302 + $0x110] sm:$0xff] %v2280
        %2357 = vst [vmem:[%s302 + $0x118] sm:$0xff] %v2281
        %2358 = vst [vmem:[%s302 + $0x120] sm:$0xff] %v2282
        %2359 = vst [vmem:[%s302 + $0x128] sm:$0xff] %v2283
        %2360 = vst [vmem:[%s302 + $0x130] sm:$0xff] %v2284
        %2361 = vst [vmem:[%s302 + $0x138] sm:$0xff] %v2285
        %2362 = vst [vmem:[%s302 + $0x140] sm:$0xff] %v2286
        %2363 = vst [vmem:[%s302 + $0x148] sm:$0xff] %v2287
        %2364 = vst [vmem:[%s302 + $0x150] sm:$0xff] %v2288
        %2365 = vst [vmem:[%s302 + $0x158] sm:$0xff] %v2289
        %2366 = vst [vmem:[%s302 + $0x160] sm:$0xff] %v2290
        %2367 = vst [vmem:[%s302 + $0x168] sm:$0xff] %v2291
        %2368 = vst [vmem:[%s302 + $0x170] sm:$0xff] %v2292
        %2369 = vst [vmem:[%s302 + $0x178] sm:$0xff] %v2293
        %2370 = vst [vmem:[%s302 + $0x180] sm:$0xff] %v2294
        %2371 = vst [vmem:[%s302 + $0x188] sm:$0xff] %v2295
        %2372 = vst [vmem:[%s302 + $0x190] sm:$0xff] %v2296
        %2373 = vst [vmem:[%s302 + $0x198] sm:$0xff] %v2297
        %2374 = vst [vmem:[%s302 + $0x1a0] sm:$0xff] %v2298
        %2375 = vst [vmem:[%s302 + $0x1a8] sm:$0xff] %v2299
        %2376 = vst [vmem:[%s302 + $0x1b0] sm:$0xff] %v2300
        %2377 = vst [vmem:[%s302 + $0x1b8] sm:$0xff] %v2301
        %2378 = vst [vmem:[%s302 + $0x1c0] sm:$0xff] %v2302
        %2379 = vst [vmem:[%s302 + $0x1c8] sm:$0xff] %v2303
        %2380 = vst [vmem:[%s302 + $0x1d0] sm:$0xff] %v2304
        %2381 = vst [vmem:[%s302 + $0x1d8] sm:$0xff] %v2305
        %2382 = vst [vmem:[%s302 + $0x1e0] sm:$0xff] %v2306
        %2383 = vst [vmem:[%s302 + $0x1e8] sm:$0xff] %v2307
        %2384 = vst [vmem:[%s302 + $0x1f0] sm:$0xff] %v2308
        %2385 = vst [vmem:[%s302 + $0x1f8] sm:$0xff] %v2309
        %2386 = vst [vmem:[%s302 + $0x200] sm:$0xff] %v2310
        %2387 = vst [vmem:[%s302 + $0x208] sm:$0xff] %v2311
        %2388 = vst [vmem:[%s302 + $0x210] sm:$0xff] %v2312
        %2389 = vst [vmem:[%s302 + $0x218] sm:$0xff] %v2313
        %2390 = vst [vmem:[%s302 + $0x220] sm:$0xff] %v2314
        %2391 = vst [vmem:[%s302 + $0x228] sm:$0xff] %v2315
        %2392 = vst [vmem:[%s302 + $0x230] sm:$0xff] %v2316
        %2393 = vst [vmem:[%s302 + $0x238] sm:$0xff] %v2317
        %2394 = vst [vmem:[%s302 + $0x240] sm:$0xff] %v2318
        %2395 = vst [vmem:[%s302 + $0x248] sm:$0xff] %v2319
        %2396 = vst [vmem:[%s302 + $0x250] sm:$0xff] %v2320
        %2397 = vst [vmem:[%s302 + $0x258] sm:$0xff] %v2321
        %s2398 = sand.u32 %s142, 1
        %s2399 = scalar_lea.sflag [#allocation4], %s2398
        %s2400 = sand.u32 %s142, 1
        %s2401 = smul.addr %s2400, 608
        %s2402 = scalar_lea.vmem [#allocation11], %s2401
        // Predicated region
        $region61: #{tpu_custom_call.1} parent=39 // pred_check
          %p2403 = pneg %p152
        $region62: #{tpu_custom_call.1} parent=39 // pred_check_branch
          %2405 = sbr.rel (%p2403) target = $region64
        $region63: #{tpu_custom_call.1} parent=39 // pred_region
          %s2406 = smul.u32 38, %s24
          %s2407 = ssub.s32 75, %s2406
          %p2408 = scmp.lt.s32.totalorder %s2407, 38
          %s2409 = scalar_select %p2408, %s2407, 38
          %s2410 = smul.u32 128, %s2409
          %s2411 = smul.u32 %s2410, 2
          %s2413 = ssub.s32 9728, %s2411
          %2414 = vsyncadd %s2399, %s2413
          %p2415 = scmp.ne.s32.totalorder 0, %s2411
          %s2416 = smul.addr %s2406, 2
          %s2417 = smul.addr %s2416, 128
          %s2418 = scalar_lea.hbm %s5, %s2417
          %s2419 = smul.u32 16, %s2409
          %s2420 = sshll.u32 %s2402, 4
          %s2421 = int_to_ptr.vmem [resolvable:$true] %s2420
          %s2422 = sshll.u32 %s2419, 4
          %2426 = dma.vmem_to_hbm [thread:$0]  (%p2415), %s2421, %s2422, %s2418, %s2399, 256, 256, 16
        $region64: #{tpu_custom_call.1} parent=39 // pred_fallthru
          _
      $region40: #{tpu_custom_call.1} parent=5 // pred_fallthru
        _
      %p2427 = scmp.le.s32.totalorder 2, %s19
      // Predicated region
      $region65: #{tpu_custom_call.1} parent=5 // pred_check
        %p2428 = pneg %p2427
      $region66: #{tpu_custom_call.1} parent=5 // pred_check_branch
        %2430 = sbr.rel (%p2428) target = $region68
      $region67: #{tpu_custom_call.1} parent=5 // pred_region
        %s2431 = ssub.s32 %s19, 2
        // Predicated region
        $region69: #{tpu_custom_call.1} parent=67 // pred_check
          %p2432 = pneg %p158
        $region70: #{tpu_custom_call.1} parent=67 // pred_check_branch
          %2434 = sbr.rel (%p2432) target = $region72
        $region71: #{tpu_custom_call.1} parent=67 // pred_region
          %s2435 = sand.u32 %s143, 1
          %s2436 = scalar_lea.sflag [#allocation4], %s2435
          %s2437 = sand.u32 %s143, 1
          %s2438 = smul.addr %s2437, 608
          %s2439 = scalar_lea.vmem [#allocation11], %s2438
          %2440 = dma.done %s2436, 9728
        $region72: #{tpu_custom_call.1} parent=67 // pred_fallthru
          _
      $region68: #{tpu_custom_call.1} parent=5 // pred_fallthru
        _
    $region6: #{tpu_custom_call.1} parent=1 // loop_footer
      %s23 = sadd.s32 1, %s19
    $region7: #{tpu_custom_call.1} parent=1 // loop_footer_branch
      %18 = sbr.rel target = $region3
    $region8: #{tpu_custom_call.1} parent=1 // loop_exit
      _
    %2441 = vsyncpa [#allocation3], 1
    %s2442 = scalar_lea.sflag [#allocation3], 1
    %2443 = vsyncpa %s2442, 1
    %2444 = vsyncpa [#allocation6], 1
    %2445 = vsyncpa [#allocation9], 1
    %2446 = vsyncpa [#allocation4], 1
    %s2447 = scalar_lea.sflag [#allocation4], 1
    %2448 = vsyncpa %s2447, 1

</llo_original>
